<compile_context>
chip_gen: v6e
topology: v6e:2x2x1
jax: 0.10.0
libtpu: 0.0.40
codegen_flags: <defaults>
</compile_context>

<pallas_src>
import jax
import jax.numpy as jnp
from jax.experimental import pallas as pl
from jax.experimental.pallas import tpu as pltpu

D_IN = 3


def _make_mlp_kernel(num_sub: int, sub: int, use_bf16_matmul: bool):
    """Build the kernel for a given sub-tiling and matmul-operand dtype."""
    mm_dtype = jnp.bfloat16 if use_bf16_matmul else jnp.float32

    def kernel(u_ref,
               w1_ref, b1_ref, w2_ref, b2_ref, w3_ref, b3_ref,
               w4_ref, b4_ref, w5_ref, b5_ref, o_ref):
        # Weight/bias tiles are tiny and VMEM-resident (constant index map).
        w1 = w1_ref[...]
        b1 = b1_ref[...]
        b2 = b2_ref[...]
        b3 = b3_ref[...]
        b4 = b4_ref[...]
        b5 = b5_ref[...]
        # Matmul operands optionally bf16; accumulation stays f32.
        w2 = w2_ref[...].astype(mm_dtype)
        w3 = w3_ref[...].astype(mm_dtype)
        w4 = w4_ref[...].astype(mm_dtype)
        w5 = w5_ref[...].astype(mm_dtype)

        def layer(w, b, h):
            # tanh / bias-add in f32 (EUP/VPU); MXU operands in mm_dtype.
            a = jnp.tanh(h).astype(mm_dtype)
            return jnp.dot(w, a, preferred_element_type=jnp.float32) + b

        # Static unroll over independent batch sub-tiles: gives the LLO
        # scheduler MXU work to co-issue with the EUP tanh of other sub-tiles.
        for s in range(num_sub):
            lo = s * sub
            us = u_ref[:, lo:lo + sub]                      # (3, sub), lane-dense
            # Layer 1 (3 -> 80): degenerate K=3 -> VPU broadcast FMAs, no MXU.
            h = (w1[:, 0:1] * us[0:1, :]
                 + w1[:, 1:2] * us[1:2, :]
                 + w1[:, 2:3] * us[2:3, :]
                 + b1)                                      # (80, sub) f32
            h = layer(w2, b2, h)                            # (80, sub)
            h = layer(w3, b3, h)                            # (80, sub)
            h = layer(w4, b4, h)                            # (40, sub)
            h = layer(w5, b5, h)                            # (4,  sub)
            o_ref[:, lo:lo + sub] = h.astype(o_ref.dtype)   # dense, unmasked vst

    return kernel


def _round_up(v, m):
    return -(-v // m) * m


def _pick_batch_tile(n, requested=None, *, max_tile=2048, min_steps=2):
    """Lane-dense tile (multiple of 128), large for low per-step overhead but
    clamped so the grid keeps >= min_steps iterations (v7x has 2 TCs)."""
    if requested is not None:
        assert requested % 128 == 0, "batch_tile must be a multiple of 128"
        return requested
    cap = _round_up(max(1, -(-n // min_steps)), 128)
    return max(128, min(max_tile, cap))


def _full_spec(shape):
    # Constant block index -> tile stays resident across the grid, no re-DMA.
    return pl.BlockSpec(shape, lambda i: (0,) * len(shape))


def net_forward(x, y, t, params, *, batch_tile=None, use_bf16_matmul=False,
                feature_major=False):
    """x, y, t: (N, 1) float32.  params: torch-layout weights (out, in),
    biases (out, 1).  Returns (N, 4) (or (4, N) if feature_major=True)."""
    n = x.shape[0]
    tile = _pick_batch_tile(n, batch_tile)
    n_pad = pl.cdiv(n, tile) * tile
    pad = n_pad - n

    # Pack inputs feature-major (3, N): batch on the lane dim, one DMA/step.
    u = jnp.concatenate(
        [x.reshape(1, n), y.reshape(1, n), t.reshape(1, n)], axis=0
    ).astype(jnp.float32)
    if pad:
        u = jnp.pad(u, ((0, 0), (0, pad)))

    w1, b1 = params["w1"], params["b1"]
    w2, b2 = params["w2"], params["b2"]
    w3, b3 = params["w3"], params["b3"]
    w4, b4 = params["w4"], params["b4"]
    w5, b5 = params["w5"], params["b5"]
    dout = w5.shape[0]

    # In-kernel sub-tiling: largest of 512/256/128 lanes dividing the tile.
    sub = next(c for c in (512, 256, 128) if tile % c == 0)
    num_sub = tile // sub

    in_specs = [pl.BlockSpec((D_IN, tile), lambda i: (0, i))]
    for arr in (w1, b1, w2, b2, w3, b3, w4, b4, w5, b5):
        in_specs.append(_full_spec(arr.shape))
    out_spec = pl.BlockSpec((dout, tile), lambda i: (0, i))

    out_t = pl.pallas_call(
        _make_mlp_kernel(num_sub, sub, use_bf16_matmul),
        out_shape=jax.ShapeDtypeStruct((dout, n_pad), jnp.float32),
        grid_spec=pltpu.PrefetchScalarGridSpec(
            num_scalar_prefetch=0,
            grid=(n_pad // tile,),
            in_specs=in_specs,
            out_specs=out_spec,
        ),
        compiler_params=pltpu.CompilerParams(
            dimension_semantics=("parallel",)),
    )(u, w1, b1, w2, b2, w3, b3, w4, b4, w5, b5)

    out_t = out_t[:, :n]
    if feature_major:
        return out_t            # (4, N): skips the XLA transpose round trip
    return out_t.T              # (N, 4): matches the PyTorch module


def init_params(key):
    """nn.Linear-style U(-1/sqrt(fan_in), +1/sqrt(fan_in)); torch layout
    weights (out, in), biases stored as (out, 1) for the feature-major kernel."""
    sizes = [(3, 80), (80, 80), (80, 80), (80, 40), (40, 4)]
    params = {}
    for idx, (fan_in, fan_out) in enumerate(sizes, start=1):
        key, kw, kb = jax.random.split(key, 3)
        bound = 1.0 / jnp.sqrt(float(fan_in))
        params[f"w{idx}"] = jax.random.uniform(
            kw, (fan_out, fan_in), jnp.float32, -bound, bound)
        params[f"b{idx}"] = jax.random.uniform(
            kb, (fan_out, 1), jnp.float32, -bound, bound)
    return params


def net_forward_ref(x, y, t, params):
    """Pure-JAX reference in the original (N, F) layout."""
    def lin(u, w, b):
        return u @ w.T + b.reshape(1, -1)

    u = jnp.concatenate([x, y, t], axis=1)              # (N, 3)
    u = lin(u, params["w1"], params["b1"])
    u = lin(jnp.tanh(u), params["w2"], params["b2"])
    u = lin(jnp.tanh(u), params["w3"], params["b3"])
    u = lin(jnp.tanh(u), params["w4"], params["b4"])
    u = lin(jnp.tanh(u), params["w5"], params["b5"])
    return u


if __name__ == "__main__":
    key = jax.random.PRNGKey(0)
    kp, kx, ky, kt, kx2, ky2, kt2 = jax.random.split(key, 7)

    params = init_params(kp)

    # 1) Small, non-multiple-of-tile batch: exercises padding; the auto tile
    #    pick clamps to 256 so the grid keeps 2 steps (both v7x TCs busy).
    n = 300
    x = jax.random.normal(kx, (n, 1), jnp.float32)
    y = jax.random.normal(ky, (n, 1), jnp.float32)
    t = jax.random.normal(kt, (n, 1), jnp.float32)
    ref = net_forward_ref(x, y, t, params)

    out = jax.block_until_ready(net_forward(x, y, t, params))
    assert out.shape == (n, 4)
    assert jnp.allclose(out, ref, atol=1e-5, rtol=1e-5)

    # 2) Exercise in-kernel sub-tiling (tile=1024 -> 2 sub-tiles of 512 lanes)
    #    plus padding, in both the f32 and bf16-MXU-operand paths.
    n2 = 1030
    x2 = jax.random.normal(kx2, (n2, 1), jnp.float32)
    y2 = jax.random.normal(ky2, (n2, 1), jnp.float32)
    t2 = jax.random.normal(kt2, (n2, 1), jnp.float32)
    ref2 = net_forward_ref(x2, y2, t2, params)

    out2 = jax.block_until_ready(
        net_forward(x2, y2, t2, params, batch_tile=1024))
    assert out2.shape == (n2, 4)
    assert jnp.allclose(out2, ref2, atol=1e-5, rtol=1e-5)

    out2_bf16 = jax.block_until_ready(
        net_forward(x2, y2, t2, params, batch_tile=1024, use_bf16_matmul=True))
    assert jnp.allclose(out2_bf16, ref2, atol=5e-2, rtol=5e-2)

    print("KERNEL_OK")
</pallas_src>

<mosaic_0001>
module attributes {stable_mosaic.version = 11 : i64} {
  func.func @kernel(%arg0: i32, %arg1: memref<3x256xf32, #tpu.memory_space<vmem>>, %arg2: memref<80x3xf32, #tpu.memory_space<vmem>>, %arg3: memref<80x1xf32, #tpu.memory_space<vmem>>, %arg4: memref<80x80xf32, #tpu.memory_space<vmem>>, %arg5: memref<80x1xf32, #tpu.memory_space<vmem>>, %arg6: memref<80x80xf32, #tpu.memory_space<vmem>>, %arg7: memref<80x1xf32, #tpu.memory_space<vmem>>, %arg8: memref<40x80xf32, #tpu.memory_space<vmem>>, %arg9: memref<40x1xf32, #tpu.memory_space<vmem>>, %arg10: memref<4x40xf32, #tpu.memory_space<vmem>>, %arg11: memref<4x1xf32, #tpu.memory_space<vmem>>, %arg12: memref<4x256xf32, #tpu.memory_space<vmem>>) attributes {dimension_semantics = [#tpu.dimension_semantics<parallel>], iteration_bounds = array<i64: 2>, scalar_prefetch = 0 : i64, scratch_operands = 0 : i64, tpu.core_type = #tpu.core_type<tc>, window_params = [{transform_indices = @transform_0, window_bounds = array<i64: 3, 256>}, {pipeline_mode = #tpu.pipeline_mode<synchronous>, transform_indices = @transform_1, window_bounds = array<i64: 80, 3>}, {pipeline_mode = #tpu.pipeline_mode<synchronous>, transform_indices = @transform_2, window_bounds = array<i64: 80, 1>}, {pipeline_mode = #tpu.pipeline_mode<synchronous>, transform_indices = @transform_3, window_bounds = array<i64: 80, 80>}, {pipeline_mode = #tpu.pipeline_mode<synchronous>, transform_indices = @transform_4, window_bounds = array<i64: 80, 1>}, {pipeline_mode = #tpu.pipeline_mode<synchronous>, transform_indices = @transform_5, window_bounds = array<i64: 80, 80>}, {pipeline_mode = #tpu.pipeline_mode<synchronous>, transform_indices = @transform_6, window_bounds = array<i64: 80, 1>}, {pipeline_mode = #tpu.pipeline_mode<synchronous>, transform_indices = @transform_7, window_bounds = array<i64: 40, 80>}, {pipeline_mode = #tpu.pipeline_mode<synchronous>, transform_indices = @transform_8, window_bounds = array<i64: 40, 1>}, {pipeline_mode = #tpu.pipeline_mode<synchronous>, transform_indices = @transform_9, window_bounds = array<i64: 4, 40>}, {pipeline_mode = #tpu.pipeline_mode<synchronous>, transform_indices = @transform_10, window_bounds = array<i64: 4, 1>}, {transform_indices = @transform_11, window_bounds = array<i64: 4, 256>}]} {
    %c0 = arith.constant 0 : index
    %c0_0 = arith.constant 0 : index
    %0 = vector.load %arg2[%c0, %c0_0] : memref<80x3xf32, #tpu.memory_space<vmem>>, vector<80x3xf32>
    %c0_1 = arith.constant 0 : index
    %c0_2 = arith.constant 0 : index
    %1 = vector.load %arg3[%c0_1, %c0_2] : memref<80x1xf32, #tpu.memory_space<vmem>>, vector<80x1xf32>
    %c0_3 = arith.constant 0 : index
    %c0_4 = arith.constant 0 : index
    %2 = vector.load %arg5[%c0_3, %c0_4] : memref<80x1xf32, #tpu.memory_space<vmem>>, vector<80x1xf32>
    %c0_5 = arith.constant 0 : index
    %c0_6 = arith.constant 0 : index
    %3 = vector.load %arg7[%c0_5, %c0_6] : memref<80x1xf32, #tpu.memory_space<vmem>>, vector<80x1xf32>
    %c0_7 = arith.constant 0 : index
    %c0_8 = arith.constant 0 : index
    %4 = vector.load %arg9[%c0_7, %c0_8] : memref<40x1xf32, #tpu.memory_space<vmem>>, vector<40x1xf32>
    %c0_9 = arith.constant 0 : index
    %c0_10 = arith.constant 0 : index
    %5 = vector.load %arg11[%c0_9, %c0_10] : memref<4x1xf32, #tpu.memory_space<vmem>>, vector<4x1xf32>
    %c0_11 = arith.constant 0 : index
    %c0_12 = arith.constant 0 : index
    %6 = vector.load %arg4[%c0_11, %c0_12] : memref<80x80xf32, #tpu.memory_space<vmem>>, vector<80x80xf32>
    %c0_13 = arith.constant 0 : index
    %c0_14 = arith.constant 0 : index
    %7 = vector.load %arg6[%c0_13, %c0_14] : memref<80x80xf32, #tpu.memory_space<vmem>>, vector<80x80xf32>
    %c0_15 = arith.constant 0 : index
    %c0_16 = arith.constant 0 : index
    %8 = vector.load %arg8[%c0_15, %c0_16] : memref<40x80xf32, #tpu.memory_space<vmem>>, vector<40x80xf32>
    %c0_17 = arith.constant 0 : index
    %c0_18 = arith.constant 0 : index
    %9 = vector.load %arg10[%c0_17, %c0_18] : memref<4x40xf32, #tpu.memory_space<vmem>>, vector<4x40xf32>
    %c0_19 = arith.constant 0 : index
    %c0_20 = arith.constant 0 : index
    %10 = vector.load %arg1[%c0_19, %c0_20] : memref<3x256xf32, #tpu.memory_space<vmem>>, vector<3x256xf32>
    %11 = vector.extract_strided_slice %0 {offsets = [0, 0], sizes = [80, 1], strides = [1, 1]} : vector<80x3xf32> to vector<80x1xf32>
    %12 = vector.extract_strided_slice %10 {offsets = [0, 0], sizes = [1, 256], strides = [1, 1]} : vector<3x256xf32> to vector<1x256xf32>
    %13 = vector.broadcast %11 : vector<80x1xf32> to vector<80x256xf32>
    %14 = vector.broadcast %12 : vector<1x256xf32> to vector<80x256xf32>
    %15 = arith.mulf %13, %14 : vector<80x256xf32>
    %16 = vector.extract_strided_slice %0 {offsets = [0, 1], sizes = [80, 1], strides = [1, 1]} : vector<80x3xf32> to vector<80x1xf32>
    %17 = vector.extract_strided_slice %10 {offsets = [1, 0], sizes = [1, 256], strides = [1, 1]} : vector<3x256xf32> to vector<1x256xf32>
    %18 = vector.broadcast %16 : vector<80x1xf32> to vector<80x256xf32>
    %19 = vector.broadcast %17 : vector<1x256xf32> to vector<80x256xf32>
    %20 = arith.mulf %18, %19 : vector<80x256xf32>
    %21 = arith.addf %15, %20 : vector<80x256xf32>
    %22 = vector.extract_strided_slice %0 {offsets = [0, 2], sizes = [80, 1], strides = [1, 1]} : vector<80x3xf32> to vector<80x1xf32>
    %23 = vector.extract_strided_slice %10 {offsets = [2, 0], sizes = [1, 256], strides = [1, 1]} : vector<3x256xf32> to vector<1x256xf32>
    %24 = vector.broadcast %22 : vector<80x1xf32> to vector<80x256xf32>
    %25 = vector.broadcast %23 : vector<1x256xf32> to vector<80x256xf32>
    %26 = arith.mulf %24, %25 : vector<80x256xf32>
    %27 = arith.addf %21, %26 : vector<80x256xf32>
    %28 = vector.broadcast %1 : vector<80x1xf32> to vector<80x256xf32>
    %29 = arith.addf %27, %28 : vector<80x256xf32>
    %30 = math.tanh %29 : vector<80x256xf32>
    %cst = arith.constant dense<0.000000e+00> : vector<80x256xf32>
    %31 = tpu.matmul %6, %30, %cst {dimension_numbers = #tpu.dot_dimension_numbers<[1], [0], [0], [1], [0, 0, 1, 1], [], []>} : vector<80x80xf32>, vector<80x256xf32>, vector<80x256xf32> -> vector<80x256xf32>
    %32 = vector.broadcast %2 : vector<80x1xf32> to vector<80x256xf32>
    %33 = arith.addf %31, %32 : vector<80x256xf32>
    %34 = math.tanh %33 : vector<80x256xf32>
    %cst_21 = arith.constant dense<0.000000e+00> : vector<80x256xf32>
    %35 = tpu.matmul %7, %34, %cst_21 {dimension_numbers = #tpu.dot_dimension_numbers<[1], [0], [0], [1], [0, 0, 1, 1], [], []>} : vector<80x80xf32>, vector<80x256xf32>, vector<80x256xf32> -> vector<80x256xf32>
    %36 = vector.broadcast %3 : vector<80x1xf32> to vector<80x256xf32>
    %37 = arith.addf %35, %36 : vector<80x256xf32>
    %38 = math.tanh %37 : vector<80x256xf32>
    %cst_22 = arith.constant dense<0.000000e+00> : vector<40x256xf32>
    %39 = tpu.matmul %8, %38, %cst_22 {dimension_numbers = #tpu.dot_dimension_numbers<[1], [0], [0], [1], [0, 0, 1, 1], [], []>} : vector<40x80xf32>, vector<80x256xf32>, vector<40x256xf32> -> vector<40x256xf32>
    %40 = vector.broadcast %4 : vector<40x1xf32> to vector<40x256xf32>
    %41 = arith.addf %39, %40 : vector<40x256xf32>
    %42 = math.tanh %41 : vector<40x256xf32>
    %cst_23 = arith.constant dense<0.000000e+00> : vector<4x256xf32>
    %43 = tpu.matmul %9, %42, %cst_23 {dimension_numbers = #tpu.dot_dimension_numbers<[1], [0], [0], [1], [0, 0, 1, 1], [], []>} : vector<4x40xf32>, vector<40x256xf32>, vector<4x256xf32> -> vector<4x256xf32>
    %44 = vector.broadcast %5 : vector<4x1xf32> to vector<4x256xf32>
    %45 = arith.addf %43, %44 : vector<4x256xf32>
    %c0_24 = arith.constant 0 : index
    %c0_25 = arith.constant 0 : index
    %46 = vector.load %arg12[%c0_24, %c0_25] : memref<4x256xf32, #tpu.memory_space<vmem>>, vector<4x256xf32>
    tpu.vector_store %arg12[%c0_24, %c0_25], %45 {strides = array<i32>} : memref<4x256xf32, #tpu.memory_space<vmem>>, vector<4x256xf32>,
    return
  }
  func.func @transform_0(%arg0: i32) -> (i32, i32) {
    %c0_i32 = arith.constant 0 : i32
    %c0_i32_0 = arith.constant 0 : i32
    return %c0_i32, %arg0 : i32, i32
  }
  func.func @transform_1(%arg0: i32) -> (i32, i32) {
    %c0_i32 = arith.constant 0 : i32
    %c0_i32_0 = arith.constant 0 : i32
    %c0_i32_1 = arith.constant 0 : i32
    return %c0_i32, %c0_i32_0 : i32, i32
  }
  func.func @transform_2(%arg0: i32) -> (i32, i32) {
    %c0_i32 = arith.constant 0 : i32
    %c0_i32_0 = arith.constant 0 : i32
    %c0_i32_1 = arith.constant 0 : i32
    return %c0_i32, %c0_i32_0 : i32, i32
  }
  func.func @transform_3(%arg0: i32) -> (i32, i32) {
    %c0_i32 = arith.constant 0 : i32
    %c0_i32_0 = arith.constant 0 : i32
    %c0_i32_1 = arith.constant 0 : i32
    return %c0_i32, %c0_i32_0 : i32, i32
  }
  func.func @transform_4(%arg0: i32) -> (i32, i32) {
    %c0_i32 = arith.constant 0 : i32
    %c0_i32_0 = arith.constant 0 : i32
    %c0_i32_1 = arith.constant 0 : i32
    return %c0_i32, %c0_i32_0 : i32, i32
  }
  func.func @transform_5(%arg0: i32) -> (i32, i32) {
    %c0_i32 = arith.constant 0 : i32
    %c0_i32_0 = arith.constant 0 : i32
    %c0_i32_1 = arith.constant 0 : i32
    return %c0_i32, %c0_i32_0 : i32, i32
  }
  func.func @transform_6(%arg0: i32) -> (i32, i32) {
    %c0_i32 = arith.constant 0 : i32
    %c0_i32_0 = arith.constant 0 : i32
    %c0_i32_1 = arith.constant 0 : i32
    return %c0_i32, %c0_i32_0 : i32, i32
  }
  func.func @transform_7(%arg0: i32) -> (i32, i32) {
    %c0_i32 = arith.constant 0 : i32
    %c0_i32_0 = arith.constant 0 : i32
    %c0_i32_1 = arith.constant 0 : i32
    return %c0_i32, %c0_i32_0 : i32, i32
  }
  func.func @transform_8(%arg0: i32) -> (i32, i32) {
    %c0_i32 = arith.constant 0 : i32
    %c0_i32_0 = arith.constant 0 : i32
    %c0_i32_1 = arith.constant 0 : i32
    return %c0_i32, %c0_i32_0 : i32, i32
  }
  func.func @transform_9(%arg0: i32) -> (i32, i32) {
    %c0_i32 = arith.constant 0 : i32
    %c0_i32_0 = arith.constant 0 : i32
    %c0_i32_1 = arith.constant 0 : i32
    return %c0_i32, %c0_i32_0 : i32, i32
  }
  func.func @transform_10(%arg0: i32) -> (i32, i32) {
    %c0_i32 = arith.constant 0 : i32
    %c0_i32_0 = arith.constant 0 : i32
    %c0_i32_1 = arith.constant 0 : i32
    return %c0_i32, %c0_i32_0 : i32, i32
  }
  func.func @transform_11(%arg0: i32) -> (i32, i32) {
    %c0_i32 = arith.constant 0 : i32
    %c0_i32_0 = arith.constant 0 : i32
    return %c0_i32, %arg0 : i32, i32
  }
}

</mosaic_0001>

<llo_original>
// kernel: tpu_custom_call.1
$region0: #{tpu_custom_call.1}
  #allocation0 [shape = 'u32[]', space=smem, size = 0x4, offset = 0x4, fixed_abs, tag = 'smem constant byte address 0x4 - core index']
  #allocation1 [shape = 'u32[144,128]{1,0:T(1,128)}', space=vmem, size = 0x12000, scoped, tag = 'internal scratch']
  %s0 = inlined_call_operand.vmem [shape: f32[3,512], index: 0, kind: input, shape index: {}]
  %s1 = inlined_call_operand.vmem [shape: f32[80,3], index: 1, kind: input, shape index: {}]
  %s2 = inlined_call_operand.vmem [shape: f32[80,1], index: 2, kind: input, shape index: {}]
  %s3 = inlined_call_operand.vmem [shape: f32[80,80], index: 3, kind: input, shape index: {}]
  %s4 = inlined_call_operand.vmem [shape: f32[80,1], index: 4, kind: input, shape index: {}]
  %s5 = inlined_call_operand.vmem [shape: f32[80,80], index: 5, kind: input, shape index: {}]
  %s6 = inlined_call_operand.vmem [shape: f32[80,1], index: 6, kind: input, shape index: {}]
  %s7 = inlined_call_operand.vmem [shape: f32[40,80], index: 7, kind: input, shape index: {}]
  %s8 = inlined_call_operand.vmem [shape: f32[40,1], index: 8, kind: input, shape index: {}]
  %s9 = inlined_call_operand.vmem [shape: f32[4,40], index: 9, kind: input, shape index: {}]
  %s10 = inlined_call_operand.vmem [shape: f32[4,1], index: 10, kind: input, shape index: {}]
  %s11 = inlined_call_operand.hbm [shape: f32[4,512], index: 11, kind: output, shape index: {}]
  %s12 = sld [smem:[#allocation0]]
  $region77: #{tpu_custom_call.1} parent=0
    _
  %s14 = ssub.s32 1, %s12
  %s15 = scalar_select 0, %s14, %s12
  $region1: #{tpu_custom_call.1} parent=0
    #allocation2 [shape = 'u8[8192]{0}', space=vmem, size = 0x2000, scoped, tag = 'output window, operand 0']
    #allocation3 [shape = 's32[2]{0}', space=sflag, size = 0x8, scoped, tag = 'scoped memory for tpu_custom_call.1']
    %16 = vsyncpa [#allocation3], 0
    %s17 = scalar_lea.sflag [#allocation3], 1
    %18 = vsyncpa %s17, 0
    loop: start=0, step=1, limit=4
    $region2: #{tpu_custom_call.1} parent=1 // loop_pre_header
      _
    $region3: #{tpu_custom_call.1} parent=1 // loop_header
      %s20 = sphi 0, %s24
      %p21 = scmp.ge.s32.totalorder %s20, 4
      %s30 = sphi 0, %s32
      %s33 = sphi 0, %s30
      %s34 = sphi 0, %s33
      %s50 = sphi 0, %s34
      %s54 = sphi 0, %s54
      %s56 = sphi 0, %s54
      %s57 = sphi 0, %s56
      %s71 = sphi 0, %s57
      %s75 = sphi 0, %s75
      %s77 = sphi 0, %s75
      %s78 = sphi 0, %s77
      %s92 = sphi 0, %s78
      %s96 = sphi 0, %s96
      %s98 = sphi 0, %s96
      %s99 = sphi 0, %s98
      %s113 = sphi 0, %s99
      %s117 = sphi 0, %s117
      %s119 = sphi 0, %s117
      %s120 = sphi 0, %s119
      %s134 = sphi 0, %s120
      %s138 = sphi 0, %s138
      %s140 = sphi 0, %s138
      %s141 = sphi 0, %s140
      %s155 = sphi 0, %s141
      %s159 = sphi 0, %s159
      %s161 = sphi 0, %s159
      %s162 = sphi 0, %s161
      %s176 = sphi 0, %s162
      %s180 = sphi 0, %s180
      %s182 = sphi 0, %s180
      %s183 = sphi 0, %s182
      %s197 = sphi 0, %s183
      %s201 = sphi 0, %s201
      %s203 = sphi 0, %s201
      %s204 = sphi 0, %s203
      %s218 = sphi 0, %s204
      %s222 = sphi 0, %s222
      %s224 = sphi 0, %s222
      %s225 = sphi 0, %s224
      %s239 = sphi 0, %s225
      %s243 = sphi 0, %s243
      %s245 = sphi 0, %s243
      %s246 = sphi 0, %s245
      %s260 = sphi 0, %s246
      %s266 = sphi 0, %s268
      %s269 = sphi 0, %s266
      %s270 = sphi 0, %s269
      %s286 = sphi 0, %s270
    $region4: #{tpu_custom_call.1} parent=1 // loop_header_branch
      %23 = sbr.rel (%p21) target = $region8
    $region5: #{tpu_custom_call.1} parent=1 // loop_body
      %s25 = ssub.s32 %s20, 1
      %s26 = ssub.s32 %s20, 2
      %s27 = sadd.s32 %s20, 1
      %s28 = ssub.s32 %s20, %s27
      %p29 = scmp.eq.s32.totalorder %s28, 0
      %s31 = sadd.s32 %s30, 1
      %s32 = scalar_select %p29, %s30, %s31
      %p35 = pneg %p29
      %p36 = scmp.eq.s32.totalorder %s20, 1
      %p37 = por %p35, %p36
      %p38 = scmp.ne.s32.totalorder %s30, %s33
      %p39 = scmp.eq.s32.totalorder %s20, 0
      %p40 = por %p38, %p39
      %p41 = scmp.ne.s32.totalorder %s30, %s33
      %p42 = scmp.eq.s32.totalorder %s25, 1
      %p43 = por %p41, %p42
      %p44 = scmp.ne.s32.totalorder %s33, %s34
      %p45 = scmp.eq.s32.totalorder %s25, 0
      %p46 = por %p44, %p45
      %p47 = scmp.ne.s32.totalorder %s33, %s34
      %p48 = scmp.eq.s32.totalorder %s26, 1
      %p49 = por %p47, %p48
      %p51 = scmp.ne.s32.totalorder %s34, %s50
      %p52 = scmp.eq.s32.totalorder %s26, 0
      %p53 = por %p51, %p52
      %s55 = sadd.s32 %s54, 1
      %p58 = scmp.eq.s32.totalorder %s20, 1
      %p59 = scmp.ne.s32.totalorder %s54, %s56
      %p60 = scmp.eq.s32.totalorder %s20, 0
      %p61 = por %p59, %p60
      %p62 = scmp.ne.s32.totalorder %s54, %s56
      %p63 = scmp.eq.s32.totalorder %s25, 1
      %p64 = por %p62, %p63
      %p65 = scmp.ne.s32.totalorder %s56, %s57
      %p66 = scmp.eq.s32.totalorder %s25, 0
      %p67 = por %p65, %p66
      %p68 = scmp.ne.s32.totalorder %s56, %s57
      %p69 = scmp.eq.s32.totalorder %s26, 1
      %p70 = por %p68, %p69
      %p72 = scmp.ne.s32.totalorder %s57, %s71
      %p73 = scmp.eq.s32.totalorder %s26, 0
      %p74 = por %p72, %p73
      %s76 = sadd.s32 %s75, 1
      %p79 = scmp.eq.s32.totalorder %s20, 1
      %p80 = scmp.ne.s32.totalorder %s75, %s77
      %p81 = scmp.eq.s32.totalorder %s20, 0
      %p82 = por %p80, %p81
      %p83 = scmp.ne.s32.totalorder %s75, %s77
      %p84 = scmp.eq.s32.totalorder %s25, 1
      %p85 = por %p83, %p84
      %p86 = scmp.ne.s32.totalorder %s77, %s78
      %p87 = scmp.eq.s32.totalorder %s25, 0
      %p88 = por %p86, %p87
      %p89 = scmp.ne.s32.totalorder %s77, %s78
      %p90 = scmp.eq.s32.totalorder %s26, 1
      %p91 = por %p89, %p90
      %p93 = scmp.ne.s32.totalorder %s78, %s92
      %p94 = scmp.eq.s32.totalorder %s26, 0
      %p95 = por %p93, %p94
      %s97 = sadd.s32 %s96, 1
      %p100 = scmp.eq.s32.totalorder %s20, 1
      %p101 = scmp.ne.s32.totalorder %s96, %s98
      %p102 = scmp.eq.s32.totalorder %s20, 0
      %p103 = por %p101, %p102
      %p104 = scmp.ne.s32.totalorder %s96, %s98
      %p105 = scmp.eq.s32.totalorder %s25, 1
      %p106 = por %p104, %p105
      %p107 = scmp.ne.s32.totalorder %s98, %s99
      %p108 = scmp.eq.s32.totalorder %s25, 0
      %p109 = por %p107, %p108
      %p110 = scmp.ne.s32.totalorder %s98, %s99
      %p111 = scmp.eq.s32.totalorder %s26, 1
      %p112 = por %p110, %p111
      %p114 = scmp.ne.s32.totalorder %s99, %s113
      %p115 = scmp.eq.s32.totalorder %s26, 0
      %p116 = por %p114, %p115
      %s118 = sadd.s32 %s117, 1
      %p121 = scmp.eq.s32.totalorder %s20, 1
      %p122 = scmp.ne.s32.totalorder %s117, %s119
      %p123 = scmp.eq.s32.totalorder %s20, 0
      %p124 = por %p122, %p123
      %p125 = scmp.ne.s32.totalorder %s117, %s119
      %p126 = scmp.eq.s32.totalorder %s25, 1
      %p127 = por %p125, %p126
      %p128 = scmp.ne.s32.totalorder %s119, %s120
      %p129 = scmp.eq.s32.totalorder %s25, 0
      %p130 = por %p128, %p129
      %p131 = scmp.ne.s32.totalorder %s119, %s120
      %p132 = scmp.eq.s32.totalorder %s26, 1
      %p133 = por %p131, %p132
      %p135 = scmp.ne.s32.totalorder %s120, %s134
      %p136 = scmp.eq.s32.totalorder %s26, 0
      %p137 = por %p135, %p136
      %s139 = sadd.s32 %s138, 1
      %p142 = scmp.eq.s32.totalorder %s20, 1
      %p143 = scmp.ne.s32.totalorder %s138, %s140
      %p144 = scmp.eq.s32.totalorder %s20, 0
      %p145 = por %p143, %p144
      %p146 = scmp.ne.s32.totalorder %s138, %s140
      %p147 = scmp.eq.s32.totalorder %s25, 1
      %p148 = por %p146, %p147
      %p149 = scmp.ne.s32.totalorder %s140, %s141
      %p150 = scmp.eq.s32.totalorder %s25, 0
      %p151 = por %p149, %p150
      %p152 = scmp.ne.s32.totalorder %s140, %s141
      %p153 = scmp.eq.s32.totalorder %s26, 1
      %p154 = por %p152, %p153
      %p156 = scmp.ne.s32.totalorder %s141, %s155
      %p157 = scmp.eq.s32.totalorder %s26, 0
      %p158 = por %p156, %p157
      %s160 = sadd.s32 %s159, 1
      %p163 = scmp.eq.s32.totalorder %s20, 1
      %p164 = scmp.ne.s32.totalorder %s159, %s161
      %p165 = scmp.eq.s32.totalorder %s20, 0
      %p166 = por %p164, %p165
      %p167 = scmp.ne.s32.totalorder %s159, %s161
      %p168 = scmp.eq.s32.totalorder %s25, 1
      %p169 = por %p167, %p168
      %p170 = scmp.ne.s32.totalorder %s161, %s162
      %p171 = scmp.eq.s32.totalorder %s25, 0
      %p172 = por %p170, %p171
      %p173 = scmp.ne.s32.totalorder %s161, %s162
      %p174 = scmp.eq.s32.totalorder %s26, 1
      %p175 = por %p173, %p174
      %p177 = scmp.ne.s32.totalorder %s162, %s176
      %p178 = scmp.eq.s32.totalorder %s26, 0
      %p179 = por %p177, %p178
      %s181 = sadd.s32 %s180, 1
      %p184 = scmp.eq.s32.totalorder %s20, 1
      %p185 = scmp.ne.s32.totalorder %s180, %s182
      %p186 = scmp.eq.s32.totalorder %s20, 0
      %p187 = por %p185, %p186
      %p188 = scmp.ne.s32.totalorder %s180, %s182
      %p189 = scmp.eq.s32.totalorder %s25, 1
      %p190 = por %p188, %p189
      %p191 = scmp.ne.s32.totalorder %s182, %s183
      %p192 = scmp.eq.s32.totalorder %s25, 0
      %p193 = por %p191, %p192
      %p194 = scmp.ne.s32.totalorder %s182, %s183
      %p195 = scmp.eq.s32.totalorder %s26, 1
      %p196 = por %p194, %p195
      %p198 = scmp.ne.s32.totalorder %s183, %s197
      %p199 = scmp.eq.s32.totalorder %s26, 0
      %p200 = por %p198, %p199
      %s202 = sadd.s32 %s201, 1
      %p205 = scmp.eq.s32.totalorder %s20, 1
      %p206 = scmp.ne.s32.totalorder %s201, %s203
      %p207 = scmp.eq.s32.totalorder %s20, 0
      %p208 = por %p206, %p207
      %p209 = scmp.ne.s32.totalorder %s201, %s203
      %p210 = scmp.eq.s32.totalorder %s25, 1
      %p211 = por %p209, %p210
      %p212 = scmp.ne.s32.totalorder %s203, %s204
      %p213 = scmp.eq.s32.totalorder %s25, 0
      %p214 = por %p212, %p213
      %p215 = scmp.ne.s32.totalorder %s203, %s204
      %p216 = scmp.eq.s32.totalorder %s26, 1
      %p217 = por %p215, %p216
      %p219 = scmp.ne.s32.totalorder %s204, %s218
      %p220 = scmp.eq.s32.totalorder %s26, 0
      %p221 = por %p219, %p220
      %s223 = sadd.s32 %s222, 1
      %p226 = scmp.eq.s32.totalorder %s20, 1
      %p227 = scmp.ne.s32.totalorder %s222, %s224
      %p228 = scmp.eq.s32.totalorder %s20, 0
      %p229 = por %p227, %p228
      %p230 = scmp.ne.s32.totalorder %s222, %s224
      %p231 = scmp.eq.s32.totalorder %s25, 1
      %p232 = por %p230, %p231
      %p233 = scmp.ne.s32.totalorder %s224, %s225
      %p234 = scmp.eq.s32.totalorder %s25, 0
      %p235 = por %p233, %p234
      %p236 = scmp.ne.s32.totalorder %s224, %s225
      %p237 = scmp.eq.s32.totalorder %s26, 1
      %p238 = por %p236, %p237
      %p240 = scmp.ne.s32.totalorder %s225, %s239
      %p241 = scmp.eq.s32.totalorder %s26, 0
      %p242 = por %p240, %p241
      %s244 = sadd.s32 %s243, 1
      %p247 = scmp.eq.s32.totalorder %s20, 1
      %p248 = scmp.ne.s32.totalorder %s243, %s245
      %p249 = scmp.eq.s32.totalorder %s20, 0
      %p250 = por %p248, %p249
      %p251 = scmp.ne.s32.totalorder %s243, %s245
      %p252 = scmp.eq.s32.totalorder %s25, 1
      %p253 = por %p251, %p252
      %p254 = scmp.ne.s32.totalorder %s245, %s246
      %p255 = scmp.eq.s32.totalorder %s25, 0
      %p256 = por %p254, %p255
      %p257 = scmp.ne.s32.totalorder %s245, %s246
      %p258 = scmp.eq.s32.totalorder %s26, 1
      %p259 = por %p257, %p258
      %p261 = scmp.ne.s32.totalorder %s246, %s260
      %p262 = scmp.eq.s32.totalorder %s26, 0
      %p263 = por %p261, %p262
      %s264 = ssub.s32 %s20, %s27
      %p265 = scmp.eq.s32.totalorder %s264, 0
      %s267 = sadd.s32 %s266, 1
      %s268 = scalar_select %p265, %s266, %s267
      %p271 = pneg %p265
      %p272 = scmp.eq.s32.totalorder %s20, 1
      %p273 = por %p271, %p272
      %p274 = scmp.ne.s32.totalorder %s266, %s269
      %p275 = scmp.eq.s32.totalorder %s20, 0
      %p276 = por %p274, %p275
      %p277 = scmp.ne.s32.totalorder %s266, %s269
      %p278 = scmp.eq.s32.totalorder %s25, 1
      %p279 = por %p277, %p278
      %p280 = scmp.ne.s32.totalorder %s269, %s270
      %p281 = scmp.eq.s32.totalorder %s25, 0
      %p282 = por %p280, %p281
      %p283 = scmp.ne.s32.totalorder %s269, %s270
      %p284 = scmp.eq.s32.totalorder %s26, 1
      %p285 = por %p283, %p284
      %p287 = scmp.ne.s32.totalorder %s270, %s286
      %p288 = scmp.eq.s32.totalorder %s26, 0
      %p289 = por %p287, %p288
      %p290 = scmp.le.s32.totalorder 1, %s20
      %p291 = scmp.lt.s32.totalorder %s20, 3
      %p292 = pnand %p290, %p291
      %p293 = pneg %p292
      // Predicated region
      $region9: #{tpu_custom_call.1} parent=5 // pred_check
        _
      $region10: #{tpu_custom_call.1} parent=5 // pred_check_branch
        %295 = sbr.rel (%p292) target = $region12
      $region11: #{tpu_custom_call.1} parent=5 // pred_region
        %s296 = ssub.s32 %s20, 1
        // Predicated region
        $region13: #{tpu_custom_call.1} parent=11 // pred_check
          %p297 = pneg %p67
        $region14: #{tpu_custom_call.1} parent=11 // pred_check_branch
          %299 = sbr.rel (%p297) target = $region16
        $region15: #{tpu_custom_call.1} parent=11 // pred_region
          _
        $region16: #{tpu_custom_call.1} parent=11 // pred_fallthru
          _
        // Predicated region
        $region17: #{tpu_custom_call.1} parent=11 // pred_check
          %p300 = pneg %p88
        $region18: #{tpu_custom_call.1} parent=11 // pred_check_branch
          %302 = sbr.rel (%p300) target = $region20
        $region19: #{tpu_custom_call.1} parent=11 // pred_region
          _
        $region20: #{tpu_custom_call.1} parent=11 // pred_fallthru
          _
        // Predicated region
        $region21: #{tpu_custom_call.1} parent=11 // pred_check
          %p303 = pneg %p109
        $region22: #{tpu_custom_call.1} parent=11 // pred_check_branch
          %305 = sbr.rel (%p303) target = $region24
        $region23: #{tpu_custom_call.1} parent=11 // pred_region
          _
        $region24: #{tpu_custom_call.1} parent=11 // pred_fallthru
          _
        // Predicated region
        $region25: #{tpu_custom_call.1} parent=11 // pred_check
          %p306 = pneg %p130
        $region26: #{tpu_custom_call.1} parent=11 // pred_check_branch
          %308 = sbr.rel (%p306) target = $region28
        $region27: #{tpu_custom_call.1} parent=11 // pred_region
          _
        $region28: #{tpu_custom_call.1} parent=11 // pred_fallthru
          _
        // Predicated region
        $region29: #{tpu_custom_call.1} parent=11 // pred_check
          %p309 = pneg %p151
        $region30: #{tpu_custom_call.1} parent=11 // pred_check_branch
          %311 = sbr.rel (%p309) target = $region32
        $region31: #{tpu_custom_call.1} parent=11 // pred_region
          _
        $region32: #{tpu_custom_call.1} parent=11 // pred_fallthru
          _
        // Predicated region
        $region33: #{tpu_custom_call.1} parent=11 // pred_check
          %p312 = pneg %p172
        $region34: #{tpu_custom_call.1} parent=11 // pred_check_branch
          %314 = sbr.rel (%p312) target = $region36
        $region35: #{tpu_custom_call.1} parent=11 // pred_region
          _
        $region36: #{tpu_custom_call.1} parent=11 // pred_fallthru
          _
        // Predicated region
        $region37: #{tpu_custom_call.1} parent=11 // pred_check
          %p315 = pneg %p193
        $region38: #{tpu_custom_call.1} parent=11 // pred_check_branch
          %317 = sbr.rel (%p315) target = $region40
        $region39: #{tpu_custom_call.1} parent=11 // pred_region
          _
        $region40: #{tpu_custom_call.1} parent=11 // pred_fallthru
          _
        // Predicated region
        $region41: #{tpu_custom_call.1} parent=11 // pred_check
          %p318 = pneg %p214
        $region42: #{tpu_custom_call.1} parent=11 // pred_check_branch
          %320 = sbr.rel (%p318) target = $region44
        $region43: #{tpu_custom_call.1} parent=11 // pred_region
          _
        $region44: #{tpu_custom_call.1} parent=11 // pred_fallthru
          _
        // Predicated region
        $region45: #{tpu_custom_call.1} parent=11 // pred_check
          %p321 = pneg %p235
        $region46: #{tpu_custom_call.1} parent=11 // pred_check_branch
          %323 = sbr.rel (%p321) target = $region48
        $region47: #{tpu_custom_call.1} parent=11 // pred_region
          _
        $region48: #{tpu_custom_call.1} parent=11 // pred_fallthru
          _
        // Predicated region
        $region49: #{tpu_custom_call.1} parent=11 // pred_check
          %p324 = pneg %p256
        $region50: #{tpu_custom_call.1} parent=11 // pred_check_branch
          %326 = sbr.rel (%p324) target = $region52
        $region51: #{tpu_custom_call.1} parent=11 // pred_region
          _
        $region52: #{tpu_custom_call.1} parent=11 // pred_fallthru
          _
      $region12: #{tpu_custom_call.1} parent=5 // pred_fallthru
        _
      %p327 = scmp.lt.s32.totalorder %s20, 2
      // Predicated region
      $region53: #{tpu_custom_call.1} parent=5 // pred_check
        %p328 = pneg %p327
      $region54: #{tpu_custom_call.1} parent=5 // pred_check_branch
        %330 = sbr.rel (%p328) target = $region56
      $region55: #{tpu_custom_call.1} parent=5 // pred_region
        // Predicated region
        $region57: #{tpu_custom_call.1} parent=55 // pred_check
          %p331 = pneg %p40
        $region58: #{tpu_custom_call.1} parent=55 // pred_check_branch
          %333 = sbr.rel (%p331) target = $region60
        $region59: #{tpu_custom_call.1} parent=55 // pred_region
          %s334 = smul.u32 2, %s20
          %p335 = scmp.lt.s32.totalorder %s334, 3
          %s336 = scalar_select %p335, %s334, 3
          %s337 = smul.addr %s336, 4
          %s338 = scalar_lea.vmem %s0, %s337
          %s339 = smul.u32 2, %s20
        $region60: #{tpu_custom_call.1} parent=55 // pred_fallthru
          _
      $region56: #{tpu_custom_call.1} parent=5 // pred_fallthru
        _
      %p340 = scmp.le.s32.totalorder 1, %s20
      %p341 = scmp.lt.s32.totalorder %s20, 3
      %p342 = pnand %p340, %p341
      %p343 = pneg %p342
      // Predicated region
      $region61: #{tpu_custom_call.1} parent=5 // pred_check
        _
      $region62: #{tpu_custom_call.1} parent=5 // pred_check_branch
        %345 = sbr.rel (%p342) target = $region64
      $region63: #{tpu_custom_call.1} parent=5 // pred_region
        %s346 = ssub.s32 %s20, 1
        %s347 = smul.u32 2, %s25
        %p348 = scmp.lt.s32.totalorder %s347, 3
        %s349 = scalar_select %p348, %s347, 3
        %s350 = smul.addr %s349, 4
        %s351 = scalar_lea.vmem %s0, %s350
        %p352 = pneg %p46
        %p353 = pneg %p43
        %p354 = pneg %p67
        %p355 = pneg %p64
        %p356 = pneg %p88
        %p357 = pneg %p85
        %p358 = pneg %p109
        %p359 = pneg %p106
        %p360 = pneg %p130
        %p361 = pneg %p127
        %p362 = pneg %p151
        %p363 = pneg %p148
        %p364 = pneg %p172
        %p365 = pneg %p169
        %p366 = pneg %p193
        %p367 = pneg %p190
        %p368 = pneg %p214
        %p369 = pneg %p211
        %p370 = pneg %p235
        %p371 = pneg %p232
        %p372 = pneg %p256
        %p373 = pneg %p253
        %p374 = pneg %p282
        %p375 = pneg %p279
        %s376 = sand.u32 %s269, 1
        %s377 = scalar_lea.sflag [#allocation3], %s376
        %s378 = sand.u32 %s269, 1
        %s379 = smul.addr %s378, 8
        %s380 = scalar_lea.vmem [#allocation2], %s379
        %s381 = smul.u32 2, %s25
        %p382 = scmp.lt.s32.totalorder %s381, 3
        %s383 = scalar_select %p382, %s381, 3
        %s384 = smul.addr %s383, 4
        %s385 = scalar_lea.vmem %s0, %s384
        %s386 = smul.u32 2, %s25
        %s387 = smul.u32 2, %s25
        %v388 = vld [vmem:[%s1] sm:$0xff]
        %v389 = vld [vmem:[%s1 + $0x8] sm:$0xff]
        %v390 = vld [vmem:[%s1 + $0x10] sm:$0xff]
        %v391 = vld [vmem:[%s1 + $0x18] sm:$0xff]
        %v392 = vld [vmem:[%s1 + $0x20] sm:$0xff]
        %v393 = vld [vmem:[%s1 + $0x28] sm:$0xff]
        %v394 = vld [vmem:[%s1 + $0x30] sm:$0xff]
        %v395 = vld [vmem:[%s1 + $0x38] sm:$0xff]
        %v396 = vld [vmem:[%s1 + $0x40] sm:$0xff]
        %v397 = vld [vmem:[%s1 + $0x48] sm:$0xff]
        %v398 = vld [vmem:[%s2] sm:$0xff]
        %v399 = vld [vmem:[%s2 + $0x8] sm:$0xff]
        %v400 = vld [vmem:[%s2 + $0x10] sm:$0xff]
        %v401 = vld [vmem:[%s2 + $0x18] sm:$0xff]
        %v402 = vld [vmem:[%s2 + $0x20] sm:$0xff]
        %v403 = vld [vmem:[%s2 + $0x28] sm:$0xff]
        %v404 = vld [vmem:[%s2 + $0x30] sm:$0xff]
        %v405 = vld [vmem:[%s2 + $0x38] sm:$0xff]
        %v406 = vld [vmem:[%s2 + $0x40] sm:$0xff]
        %v407 = vld [vmem:[%s2 + $0x48] sm:$0xff]
        %v408 = vld [vmem:[%s4] sm:$0xff]
        %v409 = vld [vmem:[%s4 + $0x8] sm:$0xff]
        %v410 = vld [vmem:[%s4 + $0x10] sm:$0xff]
        %v411 = vld [vmem:[%s4 + $0x18] sm:$0xff]
        %v412 = vld [vmem:[%s4 + $0x20] sm:$0xff]
        %v413 = vld [vmem:[%s4 + $0x28] sm:$0xff]
        %v414 = vld [vmem:[%s4 + $0x30] sm:$0xff]
        %v415 = vld [vmem:[%s4 + $0x38] sm:$0xff]
        %v416 = vld [vmem:[%s4 + $0x40] sm:$0xff]
        %v417 = vld [vmem:[%s4 + $0x48] sm:$0xff]
        %v418 = vld [vmem:[%s6] sm:$0xff]
        %v419 = vld [vmem:[%s6 + $0x8] sm:$0xff]
        %v420 = vld [vmem:[%s6 + $0x10] sm:$0xff]
        %v421 = vld [vmem:[%s6 + $0x18] sm:$0xff]
        %v422 = vld [vmem:[%s6 + $0x20] sm:$0xff]
        %v423 = vld [vmem:[%s6 + $0x28] sm:$0xff]
        %v424 = vld [vmem:[%s6 + $0x30] sm:$0xff]
        %v425 = vld [vmem:[%s6 + $0x38] sm:$0xff]
        %v426 = vld [vmem:[%s6 + $0x40] sm:$0xff]
        %v427 = vld [vmem:[%s6 + $0x48] sm:$0xff]
        %v428 = vld [vmem:[%s8] sm:$0xff]
        %v429 = vld [vmem:[%s8 + $0x8] sm:$0xff]
        %v430 = vld [vmem:[%s8 + $0x10] sm:$0xff]
        %v431 = vld [vmem:[%s8 + $0x18] sm:$0xff]
        %v432 = vld [vmem:[%s8 + $0x20] sm:$0xff]
        %v433 = vld [vmem:[%s10] sm:$0xf]
        %v434 = vld [vmem:[%s3] sm:$0xff]
        %v435 = vld [vmem:[%s3 + $0x8] sm:$0xff]
        %v436 = vld [vmem:[%s3 + $0x10] sm:$0xff]
        %v437 = vld [vmem:[%s3 + $0x18] sm:$0xff]
        %v438 = vld [vmem:[%s3 + $0x20] sm:$0xff]
        %v439 = vld [vmem:[%s3 + $0x28] sm:$0xff]
        %v440 = vld [vmem:[%s3 + $0x30] sm:$0xff]
        %v441 = vld [vmem:[%s3 + $0x38] sm:$0xff]
        %v442 = vld [vmem:[%s3 + $0x40] sm:$0xff]
        %v443 = vld [vmem:[%s3 + $0x48] sm:$0xff]
        %v444 = vld [vmem:[%s5] sm:$0xff]
        %v445 = vld [vmem:[%s5 + $0x8] sm:$0xff]
        %v446 = vld [vmem:[%s5 + $0x10] sm:$0xff]
        %v447 = vld [vmem:[%s5 + $0x18] sm:$0xff]
        %v448 = vld [vmem:[%s5 + $0x20] sm:$0xff]
        %v449 = vld [vmem:[%s5 + $0x28] sm:$0xff]
        %v450 = vld [vmem:[%s5 + $0x30] sm:$0xff]
        %v451 = vld [vmem:[%s5 + $0x38] sm:$0xff]
        %v452 = vld [vmem:[%s5 + $0x40] sm:$0xff]
        %v453 = vld [vmem:[%s5 + $0x48] sm:$0xff]
        %v454 = vld [vmem:[%s7] sm:$0xff]
        %v455 = vld [vmem:[%s7 + $0x8] sm:$0xff]
        %v456 = vld [vmem:[%s7 + $0x10] sm:$0xff]
        %v457 = vld [vmem:[%s7 + $0x18] sm:$0xff]
        %v458 = vld [vmem:[%s7 + $0x20] sm:$0xff]
        %v459 = vld [vmem:[%s9] sm:$0xf]
        %v460 = vld [vmem:[%s385] sm:$0x77]
        %462 = vset.pattern.permute.xlu0 0
        %463 = vperm.xlu0 %462, %v388
        %v464 = vpop.permute.xlu0 %463
        %467 = vset.pattern.permute.xlu0 0
        %468 = vperm.xlu0 %467, %v389
        %v469 = vpop.permute.xlu0 %468
        %472 = vset.pattern.permute.xlu0 0
        %473 = vperm.xlu0 %472, %v390
        %v474 = vpop.permute.xlu0 %473
        %477 = vset.pattern.permute.xlu0 0
        %478 = vperm.xlu0 %477, %v391
        %v479 = vpop.permute.xlu0 %478
        %482 = vset.pattern.permute.xlu0 0
        %483 = vperm.xlu0 %482, %v392
        %v484 = vpop.permute.xlu0 %483
        %487 = vset.pattern.permute.xlu0 0
        %488 = vperm.xlu0 %487, %v393
        %v489 = vpop.permute.xlu0 %488
        %492 = vset.pattern.permute.xlu0 0
        %493 = vperm.xlu0 %492, %v394
        %v494 = vpop.permute.xlu0 %493
        %497 = vset.pattern.permute.xlu0 0
        %498 = vperm.xlu0 %497, %v395
        %v499 = vpop.permute.xlu0 %498
        %502 = vset.pattern.permute.xlu0 0
        %503 = vperm.xlu0 %502, %v396
        %v504 = vpop.permute.xlu0 %503
        %507 = vset.pattern.permute.xlu0 0
        %508 = vperm.xlu0 %507, %v397
        %v509 = vpop.permute.xlu0 %508
        %v512 = vlaneseq
        %v513 = vshrl.u32 %v512, 7
        %v514 = vsub.s32 0, %v513
        %v515 = vrot.slane %v460, %v514
        %v516 = vlaneseq
        %v517 = vshrl.u32 %v516, 7
        %v518 = vsub.s32 4, %v517
        %v519 = vrot.slane %v460, %v518
        %v522 = vlaneseq
        %v523 = vshrl.u32 %v522, 7
        %v524 = vsub.s32 0, %v523
        %v525 = vrot.slane %v515, %v524
        %v526 = vlaneseq
        %v527 = vshrl.u32 %v526, 7
        %v528 = vsub.s32 0, %v527
        %v529 = vrot.slane %v519, %v528
        %v530 = vmul.f32 %v464, %v525
        %v531 = vmul.f32 %v464, %v529
        %v532 = vmul.f32 %v469, %v525
        %v533 = vmul.f32 %v469, %v529
        %v534 = vmul.f32 %v474, %v525
        %v535 = vmul.f32 %v474, %v529
        %v536 = vmul.f32 %v479, %v525
        %v537 = vmul.f32 %v479, %v529
        %v538 = vmul.f32 %v484, %v525
        %v539 = vmul.f32 %v484, %v529
        %v540 = vmul.f32 %v489, %v525
        %v541 = vmul.f32 %v489, %v529
        %v542 = vmul.f32 %v494, %v525
        %v543 = vmul.f32 %v494, %v529
        %v544 = vmul.f32 %v499, %v525
        %v545 = vmul.f32 %v499, %v529
        %v546 = vmul.f32 %v504, %v525
        %v547 = vmul.f32 %v504, %v529
        %v548 = vmul.f32 %v509, %v525
        %v549 = vmul.f32 %v509, %v529
        %550 = vset.pattern.permute.xlu0 1
        %551 = vperm.xlu0 %550, %v388
        %v552 = vpop.permute.xlu0 %551
        %554 = vset.pattern.permute.xlu0 1
        %555 = vperm.xlu0 %554, %v389
        %v556 = vpop.permute.xlu0 %555
        %558 = vset.pattern.permute.xlu0 1
        %559 = vperm.xlu0 %558, %v390
        %v560 = vpop.permute.xlu0 %559
        %562 = vset.pattern.permute.xlu0 1
        %563 = vperm.xlu0 %562, %v391
        %v564 = vpop.permute.xlu0 %563
        %566 = vset.pattern.permute.xlu0 1
        %567 = vperm.xlu0 %566, %v392
        %v568 = vpop.permute.xlu0 %567
        %570 = vset.pattern.permute.xlu0 1
        %571 = vperm.xlu0 %570, %v393
        %v572 = vpop.permute.xlu0 %571
        %574 = vset.pattern.permute.xlu0 1
        %575 = vperm.xlu0 %574, %v394
        %v576 = vpop.permute.xlu0 %575
        %578 = vset.pattern.permute.xlu0 1
        %579 = vperm.xlu0 %578, %v395
        %v580 = vpop.permute.xlu0 %579
        %582 = vset.pattern.permute.xlu0 1
        %583 = vperm.xlu0 %582, %v396
        %v584 = vpop.permute.xlu0 %583
        %586 = vset.pattern.permute.xlu0 1
        %587 = vperm.xlu0 %586, %v397
        %v588 = vpop.permute.xlu0 %587
        %v590 = vlaneseq
        %v591 = vshrl.u32 %v590, 7
        %v592 = vsub.s32 1, %v591
        %v593 = vrot.slane %v460, %v592
        %v594 = vlaneseq
        %v595 = vshrl.u32 %v594, 7
        %v596 = vsub.s32 5, %v595
        %v597 = vrot.slane %v460, %v596
        %v600 = vlaneseq
        %v601 = vshrl.u32 %v600, 7
        %v602 = vsub.s32 1, %v601
        %v603 = vrot.slane %v593, %v602
        %v604 = vlaneseq
        %v605 = vshrl.u32 %v604, 7
        %v606 = vsub.s32 1, %v605
        %v607 = vrot.slane %v597, %v606
        %v608 = vmul.f32 %v552, %v603
        %v609 = vmul.f32 %v552, %v607
        %v610 = vmul.f32 %v556, %v603
        %v611 = vmul.f32 %v556, %v607
        %v612 = vmul.f32 %v560, %v603
        %v613 = vmul.f32 %v560, %v607
        %v614 = vmul.f32 %v564, %v603
        %v615 = vmul.f32 %v564, %v607
        %v616 = vmul.f32 %v568, %v603
        %v617 = vmul.f32 %v568, %v607
        %v618 = vmul.f32 %v572, %v603
        %v619 = vmul.f32 %v572, %v607
        %v620 = vmul.f32 %v576, %v603
        %v621 = vmul.f32 %v576, %v607
        %v622 = vmul.f32 %v580, %v603
        %v623 = vmul.f32 %v580, %v607
        %v624 = vmul.f32 %v584, %v603
        %v625 = vmul.f32 %v584, %v607
        %v626 = vmul.f32 %v588, %v603
        %v627 = vmul.f32 %v588, %v607
        %v628 = vadd.f32 %v530, %v608
        %v629 = vadd.f32 %v531, %v609
        %v630 = vadd.f32 %v532, %v610
        %v631 = vadd.f32 %v533, %v611
        %v632 = vadd.f32 %v534, %v612
        %v633 = vadd.f32 %v535, %v613
        %v634 = vadd.f32 %v536, %v614
        %v635 = vadd.f32 %v537, %v615
        %v636 = vadd.f32 %v538, %v616
        %v637 = vadd.f32 %v539, %v617
        %v638 = vadd.f32 %v540, %v618
        %v639 = vadd.f32 %v541, %v619
        %v640 = vadd.f32 %v542, %v620
        %v641 = vadd.f32 %v543, %v621
        %v642 = vadd.f32 %v544, %v622
        %v643 = vadd.f32 %v545, %v623
        %v644 = vadd.f32 %v546, %v624
        %v645 = vadd.f32 %v547, %v625
        %v646 = vadd.f32 %v548, %v626
        %v647 = vadd.f32 %v549, %v627
        %648 = vset.pattern.permute.xlu0 2
        %649 = vperm.xlu0 %648, %v388
        %v650 = vpop.permute.xlu0 %649
        %652 = vset.pattern.permute.xlu0 2
        %653 = vperm.xlu0 %652, %v389
        %v654 = vpop.permute.xlu0 %653
        %656 = vset.pattern.permute.xlu0 2
        %657 = vperm.xlu0 %656, %v390
        %v658 = vpop.permute.xlu0 %657
        %660 = vset.pattern.permute.xlu0 2
        %661 = vperm.xlu0 %660, %v391
        %v662 = vpop.permute.xlu0 %661
        %664 = vset.pattern.permute.xlu0 2
        %665 = vperm.xlu0 %664, %v392
        %v666 = vpop.permute.xlu0 %665
        %668 = vset.pattern.permute.xlu0 2
        %669 = vperm.xlu0 %668, %v393
        %v670 = vpop.permute.xlu0 %669
        %672 = vset.pattern.permute.xlu0 2
        %673 = vperm.xlu0 %672, %v394
        %v674 = vpop.permute.xlu0 %673
        %676 = vset.pattern.permute.xlu0 2
        %677 = vperm.xlu0 %676, %v395
        %v678 = vpop.permute.xlu0 %677
        %680 = vset.pattern.permute.xlu0 2
        %681 = vperm.xlu0 %680, %v396
        %v682 = vpop.permute.xlu0 %681
        %684 = vset.pattern.permute.xlu0 2
        %685 = vperm.xlu0 %684, %v397
        %v686 = vpop.permute.xlu0 %685
        %v688 = vlaneseq
        %v689 = vshrl.u32 %v688, 7
        %v690 = vsub.s32 2, %v689
        %v691 = vrot.slane %v460, %v690
        %v692 = vlaneseq
        %v693 = vshrl.u32 %v692, 7
        %v694 = vsub.s32 6, %v693
        %v695 = vrot.slane %v460, %v694
        %v698 = vlaneseq
        %v699 = vshrl.u32 %v698, 7
        %v700 = vsub.s32 2, %v699
        %v701 = vrot.slane %v691, %v700
        %v702 = vlaneseq
        %v703 = vshrl.u32 %v702, 7
        %v704 = vsub.s32 2, %v703
        %v705 = vrot.slane %v695, %v704
        %v706 = vmul.f32 %v650, %v701
        %v707 = vmul.f32 %v650, %v705
        %v708 = vmul.f32 %v654, %v701
        %v709 = vmul.f32 %v654, %v705
        %v710 = vmul.f32 %v658, %v701
        %v711 = vmul.f32 %v658, %v705
        %v712 = vmul.f32 %v662, %v701
        %v713 = vmul.f32 %v662, %v705
        %v714 = vmul.f32 %v666, %v701
        %v715 = vmul.f32 %v666, %v705
        %v716 = vmul.f32 %v670, %v701
        %v717 = vmul.f32 %v670, %v705
        %v718 = vmul.f32 %v674, %v701
        %v719 = vmul.f32 %v674, %v705
        %v720 = vmul.f32 %v678, %v701
        %v721 = vmul.f32 %v678, %v705
        %v722 = vmul.f32 %v682, %v701
        %v723 = vmul.f32 %v682, %v705
        %v724 = vmul.f32 %v686, %v701
        %v725 = vmul.f32 %v686, %v705
        %v726 = vadd.f32 %v628, %v706
        %v727 = vadd.f32 %v629, %v707
        %v728 = vadd.f32 %v630, %v708
        %v729 = vadd.f32 %v631, %v709
        %v730 = vadd.f32 %v632, %v710
        %v731 = vadd.f32 %v633, %v711
        %v732 = vadd.f32 %v634, %v712
        %v733 = vadd.f32 %v635, %v713
        %v734 = vadd.f32 %v636, %v714
        %v735 = vadd.f32 %v637, %v715
        %v736 = vadd.f32 %v638, %v716
        %v737 = vadd.f32 %v639, %v717
        %v738 = vadd.f32 %v640, %v718
        %v739 = vadd.f32 %v641, %v719
        %v740 = vadd.f32 %v642, %v720
        %v741 = vadd.f32 %v643, %v721
        %v742 = vadd.f32 %v644, %v722
        %v743 = vadd.f32 %v645, %v723
        %v744 = vadd.f32 %v646, %v724
        %v745 = vadd.f32 %v647, %v725
        %747 = vset.pattern.permute.xlu0 0
        %748 = vperm.xlu0 %747, %v398
        %v749 = vpop.permute.xlu0 %748
        %752 = vset.pattern.permute.xlu0 0
        %753 = vperm.xlu0 %752, %v399
        %v754 = vpop.permute.xlu0 %753
        %757 = vset.pattern.permute.xlu0 0
        %758 = vperm.xlu0 %757, %v400
        %v759 = vpop.permute.xlu0 %758
        %762 = vset.pattern.permute.xlu0 0
        %763 = vperm.xlu0 %762, %v401
        %v764 = vpop.permute.xlu0 %763
        %767 = vset.pattern.permute.xlu0 0
        %768 = vperm.xlu0 %767, %v402
        %v769 = vpop.permute.xlu0 %768
        %772 = vset.pattern.permute.xlu0 0
        %773 = vperm.xlu0 %772, %v403
        %v774 = vpop.permute.xlu0 %773
        %777 = vset.pattern.permute.xlu0 0
        %778 = vperm.xlu0 %777, %v404
        %v779 = vpop.permute.xlu0 %778
        %782 = vset.pattern.permute.xlu0 0
        %783 = vperm.xlu0 %782, %v405
        %v784 = vpop.permute.xlu0 %783
        %787 = vset.pattern.permute.xlu0 0
        %788 = vperm.xlu0 %787, %v406
        %v789 = vpop.permute.xlu0 %788
        %792 = vset.pattern.permute.xlu0 0
        %793 = vperm.xlu0 %792, %v407
        %v794 = vpop.permute.xlu0 %793
        %v796 = vadd.f32 %v726, %v749
        %v797 = vadd.f32 %v727, %v749
        %v798 = vadd.f32 %v728, %v754
        %v799 = vadd.f32 %v729, %v754
        %v800 = vadd.f32 %v730, %v759
        %v801 = vadd.f32 %v731, %v759
        %v802 = vadd.f32 %v732, %v764
        %v803 = vadd.f32 %v733, %v764
        %v804 = vadd.f32 %v734, %v769
        %v805 = vadd.f32 %v735, %v769
        %v806 = vadd.f32 %v736, %v774
        %v807 = vadd.f32 %v737, %v774
        %v808 = vadd.f32 %v738, %v779
        %v809 = vadd.f32 %v739, %v779
        %v810 = vadd.f32 %v740, %v784
        %v811 = vadd.f32 %v741, %v784
        %v812 = vadd.f32 %v742, %v789
        %v813 = vadd.f32 %v743, %v789
        %v814 = vadd.f32 %v744, %v794
        %v815 = vadd.f32 %v745, %v794
        %v816 = vtanh.pop %v796
        %v817 = vtanh.pop %v797
        %v818 = vtanh.pop %v798
        %v819 = vtanh.pop %v799
        %v820 = vtanh.pop %v800
        %v821 = vtanh.pop %v801
        %v822 = vtanh.pop %v802
        %v823 = vtanh.pop %v803
        %v824 = vtanh.pop %v804
        %v825 = vtanh.pop %v805
        %v826 = vtanh.pop %v806
        %v827 = vtanh.pop %v807
        %v828 = vtanh.pop %v808
        %v829 = vtanh.pop %v809
        %v830 = vtanh.pop %v810
        %v831 = vtanh.pop %v811
        %v832 = vtanh.pop %v812
        %v833 = vtanh.pop %v813
        %v834 = vtanh.pop %v814
        %v835 = vtanh.pop %v815
        %837 = vset.pattern.permute.xlu0 0
        %838 = vperm.xlu0 %837, %v408
        %v839 = vpop.permute.xlu0 %838
        %842 = vset.pattern.permute.xlu0 0
        %843 = vperm.xlu0 %842, %v409
        %v844 = vpop.permute.xlu0 %843
        %847 = vset.pattern.permute.xlu0 0
        %848 = vperm.xlu0 %847, %v410
        %v849 = vpop.permute.xlu0 %848
        %852 = vset.pattern.permute.xlu0 0
        %853 = vperm.xlu0 %852, %v411
        %v854 = vpop.permute.xlu0 %853
        %857 = vset.pattern.permute.xlu0 0
        %858 = vperm.xlu0 %857, %v412
        %v859 = vpop.permute.xlu0 %858
        %862 = vset.pattern.permute.xlu0 0
        %863 = vperm.xlu0 %862, %v413
        %v864 = vpop.permute.xlu0 %863
        %867 = vset.pattern.permute.xlu0 0
        %868 = vperm.xlu0 %867, %v414
        %v869 = vpop.permute.xlu0 %868
        %872 = vset.pattern.permute.xlu0 0
        %873 = vperm.xlu0 %872, %v415
        %v874 = vpop.permute.xlu0 %873
        %877 = vset.pattern.permute.xlu0 0
        %878 = vperm.xlu0 %877, %v416
        %v879 = vpop.permute.xlu0 %878
        %882 = vset.pattern.permute.xlu0 0
        %883 = vperm.xlu0 %882, %v417
        %v884 = vpop.permute.xlu0 %883
        %vm886 = vcmask 654336
        %v888 = vsel %vm886, %v434, 0
        %v891 = vsel %vm886, %v435, 0
        %v894 = vsel %vm886, %v436, 0
        %v897 = vsel %vm886, %v437, 0
        %v900 = vsel %vm886, %v438, 0
        %v903 = vsel %vm886, %v439, 0
        %v906 = vsel %vm886, %v440, 0
        %v909 = vsel %vm886, %v441, 0
        %v912 = vsel %vm886, %v442, 0
        %v915 = vsel %vm886, %v443, 0
        %917 = vmatprep.subr.mxu0 0.0
        %918 = vmatpush1.msra.mxu0 0.0
        %919 = vmatprep.subr.mxu0 0.0
        %920 = vmatpush1.msra.mxu0 0.0
        %921 = vmatprep.subr.mxu0 0.0
        %922 = vmatpush1.msra.mxu0 0.0
        %923 = vmatprep.subr.mxu0 0.0
        %924 = vmatpush1.msra.mxu0 0.0
        %925 = vmatprep.subr.mxu0 0.0
        %926 = vmatpush1.msra.mxu0 0.0
        %927 = vmatprep.subr.mxu0 0.0
        %928 = vmatpush1.msra.mxu0 0.0
        %929 = vmatprep.subr.mxu0 %v835
        %930 = vmatpush1.msra.mxu0 %v834
        %931 = vmatprep.subr.mxu0 %v833
        %932 = vmatpush1.msra.mxu0 %v832
        %933 = vmatprep.subr.mxu0 %v831
        %934 = vmatpush1.msra.mxu0 %v830
        %935 = vmatprep.subr.mxu0 %v829
        %936 = vmatpush1.msra.mxu0 %v828
        %937 = vmatprep.subr.mxu0 %v827
        %938 = vmatpush1.msra.mxu0 %v826
        %939 = vmatprep.subr.mxu0 %v825
        %940 = vmatpush1.msra.mxu0 %v824
        %941 = vmatprep.subr.mxu0 %v823
        %942 = vmatpush1.msra.mxu0 %v822
        %943 = vmatprep.subr.mxu0 %v821
        %944 = vmatpush1.msra.mxu0 %v820
        %945 = vmatprep.subr.mxu0 %v819
        %946 = vmatpush1.msra.mxu0 %v818
        %947 = vmatprep.subr.mxu0 %v817
        %948 = vmatpush1.msra.mxu0 %v816
        %949 = vmatprep.subr.mxu0 0.0
        %950 = vmatpush2.msra.mxu0 0.0
        %951 = vmatprep.subr.mxu0 0.0
        %952 = vmatpush2.msra.mxu0 0.0
        %953 = vmatprep.subr.mxu0 0.0
        %954 = vmatpush2.msra.mxu0 0.0
        %955 = vmatprep.subr.mxu0 0.0
        %956 = vmatpush2.msra.mxu0 0.0
        %957 = vmatprep.subr.mxu0 0.0
        %958 = vmatpush2.msra.mxu0 0.0
        %959 = vmatprep.subr.mxu0 0.0
        %960 = vmatpush2.msra.mxu0 0.0
        %961 = vmatprep.subr.mxu0 0.0
        %962 = vmatpush2.msra.mxu0 0.0
        %963 = vmatprep.subr.mxu0 0.0
        %964 = vmatpush2.msra.mxu0 0.0
        %965 = vmatprep.subr.mxu0 0.0
        %966 = vmatpush2.msra.mxu0 0.0
        %967 = vmatprep.subr.mxu0 0.0
        %968 = vmatpush2.msra.mxu0 0.0
        %969 = vmatprep.subr.mxu0 0.0
        %970 = vmatpush2.msra.mxu0 0.0
        %971 = vmatprep.subr.mxu0 0.0
        %972 = vmatpush2.msra.mxu0 0.0
        %973 = vmatprep.subr.mxu0 0.0
        %974 = vmatpush2.msra.mxu0 0.0
        %975 = vmatprep.subr.mxu0 0.0
        %976 = vmatpush2.msra.mxu0 0.0
        %977 = vmatprep.subr.mxu0 0.0
        %978 = vmatpush2.msra.mxu0 0.0
        %979 = vmatprep.subr.mxu0 0.0
        %980 = vmatpush2.msra.mxu0 0.0
        %981 = vmatprep.mubr.f32.mxu0 0.0
        %982 = vmatmul.mubr.f32.gmra.mxu0 %v888
        %v983 = vpop.f32.mrf.mxu0
        %v984 = vadd.f32 %v839, %v983
        %v985 = vpop.f32.mrf.mxu0
        %v986 = vadd.f32 %v839, %v985
        %987 = vmatprep.mubr.f32.mxu0 0.0
        %988 = vmatmul.mubr.f32.gmra.mxu0 %v891
        %v989 = vpop.f32.mrf.mxu0
        %v990 = vadd.f32 %v844, %v989
        %v991 = vpop.f32.mrf.mxu0
        %v992 = vadd.f32 %v844, %v991
        %993 = vmatprep.mubr.f32.mxu0 0.0
        %994 = vmatmul.mubr.f32.gmra.mxu0 %v894
        %v995 = vpop.f32.mrf.mxu0
        %v996 = vadd.f32 %v849, %v995
        %v997 = vpop.f32.mrf.mxu0
        %v998 = vadd.f32 %v849, %v997
        %999 = vmatprep.mubr.f32.mxu0 0.0
        %1000 = vmatmul.mubr.f32.gmra.mxu0 %v897
        %v1001 = vpop.f32.mrf.mxu0
        %v1002 = vadd.f32 %v854, %v1001
        %v1003 = vpop.f32.mrf.mxu0
        %v1004 = vadd.f32 %v854, %v1003
        %1005 = vmatprep.mubr.f32.mxu0 0.0
        %1006 = vmatmul.mubr.f32.gmra.mxu0 %v900
        %v1007 = vpop.f32.mrf.mxu0
        %v1008 = vadd.f32 %v859, %v1007
        %v1009 = vpop.f32.mrf.mxu0
        %v1010 = vadd.f32 %v859, %v1009
        %1011 = vmatprep.mubr.f32.mxu0 0.0
        %1012 = vmatmul.mubr.f32.gmra.mxu0 %v903
        %v1013 = vpop.f32.mrf.mxu0
        %v1014 = vadd.f32 %v864, %v1013
        %v1015 = vpop.f32.mrf.mxu0
        %v1016 = vadd.f32 %v864, %v1015
        %1017 = vmatprep.mubr.f32.mxu0 0.0
        %1018 = vmatmul.mubr.f32.gmra.mxu0 %v906
        %v1019 = vpop.f32.mrf.mxu0
        %v1020 = vadd.f32 %v869, %v1019
        %v1021 = vpop.f32.mrf.mxu0
        %v1022 = vadd.f32 %v869, %v1021
        %1023 = vmatprep.mubr.f32.mxu0 0.0
        %1024 = vmatmul.mubr.f32.gmra.mxu0 %v909
        %v1025 = vpop.f32.mrf.mxu0
        %v1026 = vadd.f32 %v874, %v1025
        %v1027 = vpop.f32.mrf.mxu0
        %v1028 = vadd.f32 %v874, %v1027
        %1029 = vmatprep.mubr.f32.mxu0 0.0
        %1030 = vmatmul.mubr.f32.gmra.mxu0 %v912
        %v1031 = vpop.f32.mrf.mxu0
        %v1032 = vadd.f32 %v879, %v1031
        %v1033 = vpop.f32.mrf.mxu0
        %v1034 = vadd.f32 %v879, %v1033
        %1035 = vmatprep.mubr.f32.mxu0 0.0
        %1036 = vmatmul.mubr.f32.gmra.mxu0 %v915
        %v1037 = vpop.f32.mrf.mxu0
        %v1038 = vadd.f32 %v884, %v1037
        %v1039 = vpop.f32.mrf.mxu0
        %v1040 = vadd.f32 %v884, %v1039
        %1041 = vdwg.mxu0
        %v1042 = vtanh.pop %v984
        %v1043 = vtanh.pop %v986
        %v1044 = vtanh.pop %v990
        %v1045 = vtanh.pop %v992
        %v1046 = vtanh.pop %v996
        %v1047 = vtanh.pop %v998
        %v1048 = vtanh.pop %v1002
        %v1049 = vtanh.pop %v1004
        %v1050 = vtanh.pop %v1008
        %v1051 = vtanh.pop %v1010
        %v1052 = vtanh.pop %v1014
        %v1053 = vtanh.pop %v1016
        %v1054 = vtanh.pop %v1020
        %v1055 = vtanh.pop %v1022
        %v1056 = vtanh.pop %v1026
        %v1057 = vtanh.pop %v1028
        %v1058 = vtanh.pop %v1032
        %v1059 = vtanh.pop %v1034
        %v1060 = vtanh.pop %v1038
        %v1061 = vtanh.pop %v1040
        %1063 = vset.pattern.permute.xlu0 0
        %1064 = vperm.xlu0 %1063, %v418
        %v1065 = vpop.permute.xlu0 %1064
        %1068 = vset.pattern.permute.xlu0 0
        %1069 = vperm.xlu0 %1068, %v419
        %v1070 = vpop.permute.xlu0 %1069
        %1073 = vset.pattern.permute.xlu0 0
        %1074 = vperm.xlu0 %1073, %v420
        %v1075 = vpop.permute.xlu0 %1074
        %1078 = vset.pattern.permute.xlu0 0
        %1079 = vperm.xlu0 %1078, %v421
        %v1080 = vpop.permute.xlu0 %1079
        %1083 = vset.pattern.permute.xlu0 0
        %1084 = vperm.xlu0 %1083, %v422
        %v1085 = vpop.permute.xlu0 %1084
        %1088 = vset.pattern.permute.xlu0 0
        %1089 = vperm.xlu0 %1088, %v423
        %v1090 = vpop.permute.xlu0 %1089
        %1093 = vset.pattern.permute.xlu0 0
        %1094 = vperm.xlu0 %1093, %v424
        %v1095 = vpop.permute.xlu0 %1094
        %1098 = vset.pattern.permute.xlu0 0
        %1099 = vperm.xlu0 %1098, %v425
        %v1100 = vpop.permute.xlu0 %1099
        %1103 = vset.pattern.permute.xlu0 0
        %1104 = vperm.xlu0 %1103, %v426
        %v1105 = vpop.permute.xlu0 %1104
        %1108 = vset.pattern.permute.xlu0 0
        %1109 = vperm.xlu0 %1108, %v427
        %v1110 = vpop.permute.xlu0 %1109
        %v1113 = vsel %vm886, %v444, 0
        %v1116 = vsel %vm886, %v445, 0
        %v1119 = vsel %vm886, %v446, 0
        %v1122 = vsel %vm886, %v447, 0
        %v1125 = vsel %vm886, %v448, 0
        %v1128 = vsel %vm886, %v449, 0
        %v1131 = vsel %vm886, %v450, 0
        %v1134 = vsel %vm886, %v451, 0
        %v1137 = vsel %vm886, %v452, 0
        %v1140 = vsel %vm886, %v453, 0
        %1142 = vmatprep.subr.mxu0 0.0
        %1143 = vmatpush1.msra.mxu0 0.0
        %1144 = vmatprep.subr.mxu0 0.0
        %1145 = vmatpush1.msra.mxu0 0.0
        %1146 = vmatprep.subr.mxu0 0.0
        %1147 = vmatpush1.msra.mxu0 0.0
        %1148 = vmatprep.subr.mxu0 0.0
        %1149 = vmatpush1.msra.mxu0 0.0
        %1150 = vmatprep.subr.mxu0 0.0
        %1151 = vmatpush1.msra.mxu0 0.0
        %1152 = vmatprep.subr.mxu0 0.0
        %1153 = vmatpush1.msra.mxu0 0.0
        %1154 = vmatprep.subr.mxu0 %v1061
        %1155 = vmatpush1.msra.mxu0 %v1060
        %1156 = vmatprep.subr.mxu0 %v1059
        %1157 = vmatpush1.msra.mxu0 %v1058
        %1158 = vmatprep.subr.mxu0 %v1057
        %1159 = vmatpush1.msra.mxu0 %v1056
        %1160 = vmatprep.subr.mxu0 %v1055
        %1161 = vmatpush1.msra.mxu0 %v1054
        %1162 = vmatprep.subr.mxu0 %v1053
        %1163 = vmatpush1.msra.mxu0 %v1052
        %1164 = vmatprep.subr.mxu0 %v1051
        %1165 = vmatpush1.msra.mxu0 %v1050
        %1166 = vmatprep.subr.mxu0 %v1049
        %1167 = vmatpush1.msra.mxu0 %v1048
        %1168 = vmatprep.subr.mxu0 %v1047
        %1169 = vmatpush1.msra.mxu0 %v1046
        %1170 = vmatprep.subr.mxu0 %v1045
        %1171 = vmatpush1.msra.mxu0 %v1044
        %1172 = vmatprep.subr.mxu0 %v1043
        %1173 = vmatpush1.msra.mxu0 %v1042
        %1174 = vmatprep.subr.mxu0 0.0
        %1175 = vmatpush2.msra.mxu0 0.0
        %1176 = vmatprep.subr.mxu0 0.0
        %1177 = vmatpush2.msra.mxu0 0.0
        %1178 = vmatprep.subr.mxu0 0.0
        %1179 = vmatpush2.msra.mxu0 0.0
        %1180 = vmatprep.subr.mxu0 0.0
        %1181 = vmatpush2.msra.mxu0 0.0
        %1182 = vmatprep.subr.mxu0 0.0
        %1183 = vmatpush2.msra.mxu0 0.0
        %1184 = vmatprep.subr.mxu0 0.0
        %1185 = vmatpush2.msra.mxu0 0.0
        %1186 = vmatprep.subr.mxu0 0.0
        %1187 = vmatpush2.msra.mxu0 0.0
        %1188 = vmatprep.subr.mxu0 0.0
        %1189 = vmatpush2.msra.mxu0 0.0
        %1190 = vmatprep.subr.mxu0 0.0
        %1191 = vmatpush2.msra.mxu0 0.0
        %1192 = vmatprep.subr.mxu0 0.0
        %1193 = vmatpush2.msra.mxu0 0.0
        %1194 = vmatprep.subr.mxu0 0.0
        %1195 = vmatpush2.msra.mxu0 0.0
        %1196 = vmatprep.subr.mxu0 0.0
        %1197 = vmatpush2.msra.mxu0 0.0
        %1198 = vmatprep.subr.mxu0 0.0
        %1199 = vmatpush2.msra.mxu0 0.0
        %1200 = vmatprep.subr.mxu0 0.0
        %1201 = vmatpush2.msra.mxu0 0.0
        %1202 = vmatprep.subr.mxu0 0.0
        %1203 = vmatpush2.msra.mxu0 0.0
        %1204 = vmatprep.subr.mxu0 0.0
        %1205 = vmatpush2.msra.mxu0 0.0
        %1206 = vmatprep.mubr.f32.mxu0 0.0
        %1207 = vmatmul.mubr.f32.gmra.mxu0 %v1113
        %v1208 = vpop.f32.mrf.mxu0
        %v1209 = vadd.f32 %v1065, %v1208
        %v1210 = vpop.f32.mrf.mxu0
        %v1211 = vadd.f32 %v1065, %v1210
        %1212 = vmatprep.mubr.f32.mxu0 0.0
        %1213 = vmatmul.mubr.f32.gmra.mxu0 %v1116
        %v1214 = vpop.f32.mrf.mxu0
        %v1215 = vadd.f32 %v1070, %v1214
        %v1216 = vpop.f32.mrf.mxu0
        %v1217 = vadd.f32 %v1070, %v1216
        %1218 = vmatprep.mubr.f32.mxu0 0.0
        %1219 = vmatmul.mubr.f32.gmra.mxu0 %v1119
        %v1220 = vpop.f32.mrf.mxu0
        %v1221 = vadd.f32 %v1075, %v1220
        %v1222 = vpop.f32.mrf.mxu0
        %v1223 = vadd.f32 %v1075, %v1222
        %1224 = vmatprep.mubr.f32.mxu0 0.0
        %1225 = vmatmul.mubr.f32.gmra.mxu0 %v1122
        %v1226 = vpop.f32.mrf.mxu0
        %v1227 = vadd.f32 %v1080, %v1226
        %v1228 = vpop.f32.mrf.mxu0
        %v1229 = vadd.f32 %v1080, %v1228
        %1230 = vmatprep.mubr.f32.mxu0 0.0
        %1231 = vmatmul.mubr.f32.gmra.mxu0 %v1125
        %v1232 = vpop.f32.mrf.mxu0
        %v1233 = vadd.f32 %v1085, %v1232
        %v1234 = vpop.f32.mrf.mxu0
        %v1235 = vadd.f32 %v1085, %v1234
        %1236 = vmatprep.mubr.f32.mxu0 0.0
        %1237 = vmatmul.mubr.f32.gmra.mxu0 %v1128
        %v1238 = vpop.f32.mrf.mxu0
        %v1239 = vadd.f32 %v1090, %v1238
        %v1240 = vpop.f32.mrf.mxu0
        %v1241 = vadd.f32 %v1090, %v1240
        %1242 = vmatprep.mubr.f32.mxu0 0.0
        %1243 = vmatmul.mubr.f32.gmra.mxu0 %v1131
        %v1244 = vpop.f32.mrf.mxu0
        %v1245 = vadd.f32 %v1095, %v1244
        %v1246 = vpop.f32.mrf.mxu0
        %v1247 = vadd.f32 %v1095, %v1246
        %1248 = vmatprep.mubr.f32.mxu0 0.0
        %1249 = vmatmul.mubr.f32.gmra.mxu0 %v1134
        %v1250 = vpop.f32.mrf.mxu0
        %v1251 = vadd.f32 %v1100, %v1250
        %v1252 = vpop.f32.mrf.mxu0
        %v1253 = vadd.f32 %v1100, %v1252
        %1254 = vmatprep.mubr.f32.mxu0 0.0
        %1255 = vmatmul.mubr.f32.gmra.mxu0 %v1137
        %v1256 = vpop.f32.mrf.mxu0
        %v1257 = vadd.f32 %v1105, %v1256
        %v1258 = vpop.f32.mrf.mxu0
        %v1259 = vadd.f32 %v1105, %v1258
        %1260 = vmatprep.mubr.f32.mxu0 0.0
        %1261 = vmatmul.mubr.f32.gmra.mxu0 %v1140
        %v1262 = vpop.f32.mrf.mxu0
        %v1263 = vadd.f32 %v1110, %v1262
        %v1264 = vpop.f32.mrf.mxu0
        %v1265 = vadd.f32 %v1110, %v1264
        %1266 = vdwg.mxu0
        %v1267 = vtanh.pop %v1209
        %v1268 = vtanh.pop %v1211
        %v1269 = vtanh.pop %v1215
        %v1270 = vtanh.pop %v1217
        %v1271 = vtanh.pop %v1221
        %v1272 = vtanh.pop %v1223
        %v1273 = vtanh.pop %v1227
        %v1274 = vtanh.pop %v1229
        %v1275 = vtanh.pop %v1233
        %v1276 = vtanh.pop %v1235
        %v1277 = vtanh.pop %v1239
        %v1278 = vtanh.pop %v1241
        %v1279 = vtanh.pop %v1245
        %v1280 = vtanh.pop %v1247
        %v1281 = vtanh.pop %v1251
        %v1282 = vtanh.pop %v1253
        %v1283 = vtanh.pop %v1257
        %v1284 = vtanh.pop %v1259
        %v1285 = vtanh.pop %v1263
        %v1286 = vtanh.pop %v1265
        %1288 = vset.pattern.permute.xlu0 0
        %1289 = vperm.xlu0 %1288, %v428
        %v1290 = vpop.permute.xlu0 %1289
        %1293 = vset.pattern.permute.xlu0 0
        %1294 = vperm.xlu0 %1293, %v429
        %v1295 = vpop.permute.xlu0 %1294
        %1298 = vset.pattern.permute.xlu0 0
        %1299 = vperm.xlu0 %1298, %v430
        %v1300 = vpop.permute.xlu0 %1299
        %1303 = vset.pattern.permute.xlu0 0
        %1304 = vperm.xlu0 %1303, %v431
        %v1305 = vpop.permute.xlu0 %1304
        %1308 = vset.pattern.permute.xlu0 0
        %1309 = vperm.xlu0 %1308, %v432
        %v1310 = vpop.permute.xlu0 %1309
        %v1313 = vsel %vm886, %v454, 0
        %v1316 = vsel %vm886, %v455, 0
        %v1319 = vsel %vm886, %v456, 0
        %v1322 = vsel %vm886, %v457, 0
        %v1325 = vsel %vm886, %v458, 0
        %1327 = vmatprep.subr.mxu0 0.0
        %1328 = vmatpush1.msra.mxu0 0.0
        %1329 = vmatprep.subr.mxu0 0.0
        %1330 = vmatpush1.msra.mxu0 0.0
        %1331 = vmatprep.subr.mxu0 0.0
        %1332 = vmatpush1.msra.mxu0 0.0
        %1333 = vmatprep.subr.mxu0 0.0
        %1334 = vmatpush1.msra.mxu0 0.0
        %1335 = vmatprep.subr.mxu0 0.0
        %1336 = vmatpush1.msra.mxu0 0.0
        %1337 = vmatprep.subr.mxu0 0.0
        %1338 = vmatpush1.msra.mxu0 0.0
        %1339 = vmatprep.subr.mxu0 %v1286
        %1340 = vmatpush1.msra.mxu0 %v1285
        %1341 = vmatprep.subr.mxu0 %v1284
        %1342 = vmatpush1.msra.mxu0 %v1283
        %1343 = vmatprep.subr.mxu0 %v1282
        %1344 = vmatpush1.msra.mxu0 %v1281
        %1345 = vmatprep.subr.mxu0 %v1280
        %1346 = vmatpush1.msra.mxu0 %v1279
        %1347 = vmatprep.subr.mxu0 %v1278
        %1348 = vmatpush1.msra.mxu0 %v1277
        %1349 = vmatprep.subr.mxu0 %v1276
        %1350 = vmatpush1.msra.mxu0 %v1275
        %1351 = vmatprep.subr.mxu0 %v1274
        %1352 = vmatpush1.msra.mxu0 %v1273
        %1353 = vmatprep.subr.mxu0 %v1272
        %1354 = vmatpush1.msra.mxu0 %v1271
        %1355 = vmatprep.subr.mxu0 %v1270
        %1356 = vmatpush1.msra.mxu0 %v1269
        %1357 = vmatprep.subr.mxu0 %v1268
        %1358 = vmatpush1.msra.mxu0 %v1267
        %1359 = vmatprep.subr.mxu0 0.0
        %1360 = vmatpush2.msra.mxu0 0.0
        %1361 = vmatprep.subr.mxu0 0.0
        %1362 = vmatpush2.msra.mxu0 0.0
        %1363 = vmatprep.subr.mxu0 0.0
        %1364 = vmatpush2.msra.mxu0 0.0
        %1365 = vmatprep.subr.mxu0 0.0
        %1366 = vmatpush2.msra.mxu0 0.0
        %1367 = vmatprep.subr.mxu0 0.0
        %1368 = vmatpush2.msra.mxu0 0.0
        %1369 = vmatprep.subr.mxu0 0.0
        %1370 = vmatpush2.msra.mxu0 0.0
        %1371 = vmatprep.subr.mxu0 0.0
        %1372 = vmatpush2.msra.mxu0 0.0
        %1373 = vmatprep.subr.mxu0 0.0
        %1374 = vmatpush2.msra.mxu0 0.0
        %1375 = vmatprep.subr.mxu0 0.0
        %1376 = vmatpush2.msra.mxu0 0.0
        %1377 = vmatprep.subr.mxu0 0.0
        %1378 = vmatpush2.msra.mxu0 0.0
        %1379 = vmatprep.subr.mxu0 0.0
        %1380 = vmatpush2.msra.mxu0 0.0
        %1381 = vmatprep.subr.mxu0 0.0
        %1382 = vmatpush2.msra.mxu0 0.0
        %1383 = vmatprep.subr.mxu0 0.0
        %1384 = vmatpush2.msra.mxu0 0.0
        %1385 = vmatprep.subr.mxu0 0.0
        %1386 = vmatpush2.msra.mxu0 0.0
        %1387 = vmatprep.subr.mxu0 0.0
        %1388 = vmatpush2.msra.mxu0 0.0
        %1389 = vmatprep.subr.mxu0 0.0
        %1390 = vmatpush2.msra.mxu0 0.0
        %1391 = vmatprep.mubr.f32.mxu0 0.0
        %1392 = vmatmul.mubr.f32.gmra.mxu0 %v1313
        %v1393 = vpop.f32.mrf.mxu0
        %v1394 = vadd.f32 %v1290, %v1393
        %v1395 = vpop.f32.mrf.mxu0
        %v1396 = vadd.f32 %v1290, %v1395
        %1397 = vmatprep.mubr.f32.mxu0 0.0
        %1398 = vmatmul.mubr.f32.gmra.mxu0 %v1316
        %v1399 = vpop.f32.mrf.mxu0
        %v1400 = vadd.f32 %v1295, %v1399
        %v1401 = vpop.f32.mrf.mxu0
        %v1402 = vadd.f32 %v1295, %v1401
        %1403 = vmatprep.mubr.f32.mxu0 0.0
        %1404 = vmatmul.mubr.f32.gmra.mxu0 %v1319
        %v1405 = vpop.f32.mrf.mxu0
        %v1406 = vadd.f32 %v1300, %v1405
        %v1407 = vpop.f32.mrf.mxu0
        %v1408 = vadd.f32 %v1300, %v1407
        %1409 = vmatprep.mubr.f32.mxu0 0.0
        %1410 = vmatmul.mubr.f32.gmra.mxu0 %v1322
        %v1411 = vpop.f32.mrf.mxu0
        %v1412 = vadd.f32 %v1305, %v1411
        %v1413 = vpop.f32.mrf.mxu0
        %v1414 = vadd.f32 %v1305, %v1413
        %1415 = vmatprep.mubr.f32.mxu0 0.0
        %1416 = vmatmul.mubr.f32.gmra.mxu0 %v1325
        %v1417 = vpop.f32.mrf.mxu0
        %v1418 = vadd.f32 %v1310, %v1417
        %v1419 = vpop.f32.mrf.mxu0
        %v1420 = vadd.f32 %v1310, %v1419
        %1421 = vdwg.mxu0
        %v1422 = vtanh.pop %v1394
        %v1423 = vtanh.pop %v1396
        %v1424 = vtanh.pop %v1400
        %v1425 = vtanh.pop %v1402
        %v1426 = vtanh.pop %v1406
        %v1427 = vtanh.pop %v1408
        %v1428 = vtanh.pop %v1412
        %v1429 = vtanh.pop %v1414
        %v1430 = vtanh.pop %v1418
        %v1431 = vtanh.pop %v1420
        %1433 = vset.pattern.permute.xlu0 0
        %1434 = vperm.xlu0 %1433, %v433
        %v1435 = vpop.permute.xlu0 %1434
        %vm1437 = vcmask 326656
        %v1439 = vsel %vm1437, %v459, 0
        %1441 = vmatprep.subr.mxu0 0.0
        %1442 = vmatpush1.msra.mxu0 0.0
        %1443 = vmatprep.subr.mxu0 0.0
        %1444 = vmatpush1.msra.mxu0 0.0
        %1445 = vmatprep.subr.mxu0 0.0
        %1446 = vmatpush1.msra.mxu0 0.0
        %1447 = vmatprep.subr.mxu0 0.0
        %1448 = vmatpush1.msra.mxu0 0.0
        %1449 = vmatprep.subr.mxu0 0.0
        %1450 = vmatpush1.msra.mxu0 0.0
        %1451 = vmatprep.subr.mxu0 0.0
        %1452 = vmatpush1.msra.mxu0 0.0
        %1453 = vmatprep.subr.mxu0 0.0
        %1454 = vmatpush1.msra.mxu0 0.0
        %1455 = vmatprep.subr.mxu0 0.0
        %1456 = vmatpush1.msra.mxu0 0.0
        %1457 = vmatprep.subr.mxu0 0.0
        %1458 = vmatpush1.msra.mxu0 0.0
        %1459 = vmatprep.subr.mxu0 0.0
        %1460 = vmatpush1.msra.mxu0 0.0
        %1461 = vmatprep.subr.mxu0 0.0
        %1462 = vmatpush1.msra.mxu0 0.0
        %1463 = vmatprep.subr.mxu0 %v1431
        %1464 = vmatpush1.msra.mxu0 %v1430
        %1465 = vmatprep.subr.mxu0 %v1429
        %1466 = vmatpush1.msra.mxu0 %v1428
        %1467 = vmatprep.subr.mxu0 %v1427
        %1468 = vmatpush1.msra.mxu0 %v1426
        %1469 = vmatprep.subr.mxu0 %v1425
        %1470 = vmatpush1.msra.mxu0 %v1424
        %1471 = vmatprep.subr.mxu0 %v1423
        %1472 = vmatpush1.msra.mxu0 %v1422
        %1473 = vmatprep.subr.mxu0 0.0
        %1474 = vmatpush2.msra.mxu0 0.0
        %1475 = vmatprep.subr.mxu0 0.0
        %1476 = vmatpush2.msra.mxu0 0.0
        %1477 = vmatprep.subr.mxu0 0.0
        %1478 = vmatpush2.msra.mxu0 0.0
        %1479 = vmatprep.subr.mxu0 0.0
        %1480 = vmatpush2.msra.mxu0 0.0
        %1481 = vmatprep.subr.mxu0 0.0
        %1482 = vmatpush2.msra.mxu0 0.0
        %1483 = vmatprep.subr.mxu0 0.0
        %1484 = vmatpush2.msra.mxu0 0.0
        %1485 = vmatprep.subr.mxu0 0.0
        %1486 = vmatpush2.msra.mxu0 0.0
        %1487 = vmatprep.subr.mxu0 0.0
        %1488 = vmatpush2.msra.mxu0 0.0
        %1489 = vmatprep.subr.mxu0 0.0
        %1490 = vmatpush2.msra.mxu0 0.0
        %1491 = vmatprep.subr.mxu0 0.0
        %1492 = vmatpush2.msra.mxu0 0.0
        %1493 = vmatprep.subr.mxu0 0.0
        %1494 = vmatpush2.msra.mxu0 0.0
        %1495 = vmatprep.subr.mxu0 0.0
        %1496 = vmatpush2.msra.mxu0 0.0
        %1497 = vmatprep.subr.mxu0 0.0
        %1498 = vmatpush2.msra.mxu0 0.0
        %1499 = vmatprep.subr.mxu0 0.0
        %1500 = vmatpush2.msra.mxu0 0.0
        %1501 = vmatprep.subr.mxu0 0.0
        %1502 = vmatpush2.msra.mxu0 0.0
        %1503 = vmatprep.subr.mxu0 0.0
        %1504 = vmatpush2.msra.mxu0 0.0
        %1505 = vmatprep.mubr.f32.mxu0 0.0
        %1506 = vmatmul.mubr.f32.gmra.mxu0 %v1439
        %v1507 = vpop.f32.mrf.mxu0
        %v1508 = vadd.f32 %v1435, %v1507
        %v1509 = vpop.f32.mrf.mxu0
        %v1510 = vadd.f32 %v1435, %v1509
        %1511 = vdwg.mxu0
        %v1514 = vcombine.low %v1508, %v1510
        %1516 = vst [vmem:[%s380] sm:$0xff] %v1514
        %s1517 = sand.u32 %s269, 1
        %s1518 = scalar_lea.sflag [#allocation3], %s1517
        %s1519 = sand.u32 %s269, 1
        %s1520 = smul.addr %s1519, 8
        %s1521 = scalar_lea.vmem [#allocation2], %s1520
        // Predicated region
        $region65: #{tpu_custom_call.1} parent=63 // pred_check
          %p1522 = pneg %p279
        $region66: #{tpu_custom_call.1} parent=63 // pred_check_branch
          %1524 = sbr.rel (%p1522) target = $region68
        $region67: #{tpu_custom_call.1} parent=63 // pred_region
          %s1525 = smul.u32 2, %s25
          %s1527 = ssub.s32 128, 128
          %1528 = vsyncadd %s1518, %s1527
          %s1529 = smul.addr %s1525, 64
          %s1530 = scalar_lea.hbm %s11, %s1529
          %s1532 = sshll.u32 %s1521, 4
          %s1533 = int_to_ptr.vmem [resolvable:$true] %s1532
          %1535 = dma.vmem_to_hbm [thread:$0]  %s1533, 128, %s1530, %s1518
        $region68: #{tpu_custom_call.1} parent=63 // pred_fallthru
          _
      $region64: #{tpu_custom_call.1} parent=5 // pred_fallthru
        _
      %p1536 = scmp.le.s32.totalorder 2, %s20
      // Predicated region
      $region69: #{tpu_custom_call.1} parent=5 // pred_check
        %p1537 = pneg %p1536
      $region70: #{tpu_custom_call.1} parent=5 // pred_check_branch
        %1539 = sbr.rel (%p1537) target = $region72
      $region71: #{tpu_custom_call.1} parent=5 // pred_region
        %s1540 = ssub.s32 %s20, 2
        // Predicated region
        $region73: #{tpu_custom_call.1} parent=71 // pred_check
          %p1541 = pneg %p285
        $region74: #{tpu_custom_call.1} parent=71 // pred_check_branch
          %1543 = sbr.rel (%p1541) target = $region76
        $region75: #{tpu_custom_call.1} parent=71 // pred_region
          %s1544 = sand.u32 %s270, 1
          %s1545 = scalar_lea.sflag [#allocation3], %s1544
          %s1546 = sand.u32 %s270, 1
          %s1547 = smul.addr %s1546, 8
          %s1548 = scalar_lea.vmem [#allocation2], %s1547
          %1549 = dma.done %s1545, 128
        $region76: #{tpu_custom_call.1} parent=71 // pred_fallthru
          _
      $region72: #{tpu_custom_call.1} parent=5 // pred_fallthru
        _
    $region6: #{tpu_custom_call.1} parent=1 // loop_footer
      %s24 = sadd.s32 1, %s20
    $region7: #{tpu_custom_call.1} parent=1 // loop_footer_branch
      %19 = sbr.rel target = $region3
    $region8: #{tpu_custom_call.1} parent=1 // loop_exit
      _
    %1550 = vsyncpa [#allocation3], 1
    %s1551 = scalar_lea.sflag [#allocation3], 1
    %1552 = vsyncpa %s1551, 1

</llo_original>
